<compile_context>
chip_gen: v6e
topology: v6e:2x2x1
jax: 0.10.0
libtpu: 0.0.40
codegen_flags: <defaults>
</compile_context>

<pallas_src>
import functools
import math

import jax
import jax.numpy as jnp
from jax.experimental import pallas as pl
from jax.experimental.pallas import tpu as pltpu


def attention_lstm_kernel(x_ref, a_ref, w_ref, b_ref, h_out_ref,
                          h_sc, c_sc, *, D, H, t_chunk):
    chunk = pl.program_id(0)

    A = a_ref[...]                       # (N, H, 16) f32, resident across grid
    W = w_ref[...]                       # (D + 2H, 4H) fused gate weights
    B = b_ref[...]                       # (1, 4H)
    inv_sqrt_h = 1.0 / math.sqrt(H)

    @pl.when(chunk == 0)
    def _():
        h0 = jnp.mean(A, axis=-1)        # == A.mean(dim=(2,3)) in torch
        h_sc[...] = h0
        c_sc[...] = h0

    prev_h = h_sc[...]                   # (N, H)
    prev_c = c_sc[...]                   # (N, H)

    # Static unroll over the time chunk: all slices below are compile-time
    # constants, so x loads and h stores stay simple static lane slices.
    for t in range(t_chunk):
        x_t = x_ref[:, t * D:(t + 1) * D]                      # (N, D)

        # --- dot-product attention -----------------------------------------
        # scores[n,k] = sum_h prev_h[n,h] * A[n,h,k] / sqrt(H)
        # (XLU reductions; negligible at N=2 -- switch to batched dot_general
        #  on MXU if the batch dimension grows.)
        scores = jnp.sum(prev_h[:, :, None] * A, axis=1) * inv_sqrt_h  # (N,16)
        scores = scores - jnp.max(scores, axis=-1, keepdims=True)
        e = jnp.exp(scores)
        m = e * pl.reciprocal(jnp.sum(e, axis=-1, keepdims=True), approx=False)
        attn = jnp.sum(A * m[:, None, :], axis=-1)             # (N, H)

        # --- fused LSTM gate matmul (single MXU dot) ------------------------
        z = jnp.concatenate([x_t, prev_h, attn], axis=1)       # (N, D+2H)
        vanilla = jnp.dot(z, W, preferred_element_type=jnp.float32) + B

        sig = jax.nn.sigmoid(vanilla[:, 0:3 * H])   # i|f|o: one EUP launch
        g = jnp.tanh(vanilla[:, 3 * H:4 * H])       # g:     one EUP launch
        i = sig[:, 0:H]
        f = sig[:, H:2 * H]
        o = sig[:, 2 * H:3 * H]

        prev_c = f * prev_c + i * g
        prev_h = o * jnp.tanh(prev_c)

        # lane-dense store into the (N, t_chunk*H) output slab
        h_out_ref[:, t * H:(t + 1) * H] = prev_h.astype(h_out_ref.dtype)

    h_sc[...] = prev_h
    c_sc[...] = prev_c


def attention_lstm_forward(x, A, Wx, Wh, Wattn, b, t_chunk=None):
    """x: (N, T, D) f32, A: (N, H, 4, 4) f32 -> h: (N, T, H) f32."""
    N, T, D = x.shape
    H = A.shape[1]

    if t_chunk is None:
        # For small T run the whole sequence in one grid step.  For large T,
        # pick a divisor with (t_chunk*D) % 128 == 0 and (t_chunk*H) % 128 == 0
        # so chunked blocks remain lane-legal, and budget VMEM per generation
        # (<= ~8-16 MiB x-slab on v7x's 64 MiB VMEM).
        t_chunk = T
    assert T % t_chunk == 0
    n_chunks = T // t_chunk

    # Contiguous reshapes only -- no HBM transpose round trips.
    x_flat = x.reshape(N, T * D)                   # (N, T*D)
    A_flat = A.reshape(N, H, 16)                   # (N, H, 16)
    W = jnp.concatenate([Wx, Wh, Wattn], axis=0)   # (D + 2H, 4H) fused weight
    b2 = b.reshape(1, 4 * H)                       # (1, 4H)

    kernel = functools.partial(attention_lstm_kernel, D=D, H=H, t_chunk=t_chunk)

    h_flat = pl.pallas_call(
        kernel,
        out_shape=jax.ShapeDtypeStruct((N, T * H), x.dtype),
        grid_spec=pltpu.PrefetchScalarGridSpec(
            num_scalar_prefetch=0,
            grid=(n_chunks,),
            in_specs=[
                pl.BlockSpec((N, t_chunk * D), lambda c: (0, c)),      # x slab
                pl.BlockSpec((N, H, 16), lambda c: (0, 0, 0)),         # A
                pl.BlockSpec((D + 2 * H, 4 * H), lambda c: (0, 0)),    # fused W
                pl.BlockSpec((1, 4 * H), lambda c: (0, 0)),            # bias
            ],
            out_specs=pl.BlockSpec((N, t_chunk * H), lambda c: (0, c)),
            scratch_shapes=[
                pltpu.VMEM((N, H), jnp.float32),   # h carry across chunks
                pltpu.VMEM((N, H), jnp.float32),   # c carry across chunks
            ],
        ),
        compiler_params=pltpu.CompilerParams(
            dimension_semantics=("arbitrary",)),   # sequential recurrence
    )(x_flat, A_flat, W, b2)

    return h_flat.reshape(N, T, H)


# ----------------------------- pure-JAX reference ----------------------------
def _reference(x, A, Wx, Wh, Wattn, b):
    N, T, D = x.shape
    H = A.shape[1]
    A_flat = A.reshape(N, H, 16)
    h0 = jnp.mean(A_flat, axis=-1)
    prev_h, prev_c = h0, h0
    hs = []
    for t in range(T):
        scores = jnp.einsum('nh,nhk->nk', prev_h, A_flat) / math.sqrt(H)
        m = jax.nn.softmax(scores, axis=-1)
        attn = jnp.einsum('nhk,nk->nh', A_flat, m)
        vanilla = prev_h @ Wh + x[:, t, :] @ Wx + attn @ Wattn + b
        i = jax.nn.sigmoid(vanilla[:, 0:H])
        f = jax.nn.sigmoid(vanilla[:, H:2 * H])
        o = jax.nn.sigmoid(vanilla[:, 2 * H:3 * H])
        g = jnp.tanh(vanilla[:, 3 * H:4 * H])
        prev_c = f * prev_c + i * g
        prev_h = o * jnp.tanh(prev_c)
        hs.append(prev_h)
    return jnp.stack(hs, axis=1)


if __name__ == "__main__":
    N, T, D, H = 2, 8, 4, 32           # batch, seq, input_size, hidden_size

    key = jax.random.PRNGKey(0)
    kx, ka, kwx, kwh, kwa = jax.random.split(key, 5)

    x = jax.random.normal(kx, (N, T, D), dtype=jnp.float32)
    A = jax.random.normal(ka, (N, H, 4, 4), dtype=jnp.float32)

    # deterministic parameter init matching the module's __init__
    Wx = jax.random.normal(kwx, (D, 4 * H), dtype=jnp.float32) / math.sqrt(D)
    Wh = jax.random.normal(kwh, (H, 4 * H), dtype=jnp.float32) / math.sqrt(H)
    Wattn = jax.random.normal(kwa, (H, 4 * H), dtype=jnp.float32) / math.sqrt(H)
    b = jnp.zeros((4 * H,), dtype=jnp.float32)

    h = attention_lstm_forward(x, A, Wx, Wh, Wattn, b)
    h = jax.block_until_ready(h)

    h_ref = _reference(x, A, Wx, Wh, Wattn, b)
    assert h.shape == (N, T, H)
    assert jnp.allclose(h, h_ref, atol=1e-5, rtol=1e-5), float(jnp.max(jnp.abs(h - h_ref)))

    print("KERNEL_OK")
</pallas_src>

<mosaic_0001>
module attributes {stable_mosaic.version = 11 : i64} {
  func.func @attention_lstm_kernel(%arg0: i32, %arg1: memref<2x32xf32, #tpu.memory_space<vmem>>, %arg2: memref<2x32x16xf32, #tpu.memory_space<vmem>>, %arg3: memref<68x128xf32, #tpu.memory_space<vmem>>, %arg4: memref<1x128xf32, #tpu.memory_space<vmem>>, %arg5: memref<2x256xf32, #tpu.memory_space<vmem>>, %arg6: memref<2x32xf32, #tpu.memory_space<vmem>>, %arg7: memref<2x32xf32, #tpu.memory_space<vmem>>) attributes {dimension_semantics = [#tpu.dimension_semantics<arbitrary>], iteration_bounds = array<i64: 1>, scalar_prefetch = 0 : i64, scratch_operands = 2 : i64, tpu.core_type = #tpu.core_type<tc>, window_params = [{transform_indices = @transform_0, window_bounds = array<i64: 2, 32>}, {pipeline_mode = #tpu.pipeline_mode<synchronous>, transform_indices = @transform_1, window_bounds = array<i64: 2, 32, 16>}, {pipeline_mode = #tpu.pipeline_mode<synchronous>, transform_indices = @transform_2, window_bounds = array<i64: 68, 128>}, {pipeline_mode = #tpu.pipeline_mode<synchronous>, transform_indices = @transform_3, window_bounds = array<i64: 1, 128>}, {transform_indices = @transform_4, window_bounds = array<i64: 2, 256>}]} {
    %c0 = arith.constant 0 : index
    %c0_0 = arith.constant 0 : index
    %c0_1 = arith.constant 0 : index
    %0 = vector.load %arg2[%c0, %c0_0, %c0_1] : memref<2x32x16xf32, #tpu.memory_space<vmem>>, vector<2x32x16xf32>
    %c0_2 = arith.constant 0 : index
    %c0_3 = arith.constant 0 : index
    %1 = vector.load %arg3[%c0_2, %c0_3] : memref<68x128xf32, #tpu.memory_space<vmem>>, vector<68x128xf32>
    %c0_4 = arith.constant 0 : index
    %c0_5 = arith.constant 0 : index
    %2 = vector.load %arg4[%c0_4, %c0_5] : memref<1x128xf32, #tpu.memory_space<vmem>>, vector<1x128xf32>
    %c0_i32 = arith.constant 0 : i32
    %3 = arith.cmpi eq, %arg0, %c0_i32 : i32
    %4 = arith.extui %3 : i1 to i32
    %c0_i32_6 = arith.constant 0 : i32
    %5 = arith.cmpi ne, %4, %c0_i32_6 : i32
    scf.if %5 {
      %cst_88 = arith.constant dense<0.000000e+00> : vector<2x32xf32>
      %346 = vector.multi_reduction <add>, %0, %cst_88 [2] : vector<2x32x16xf32> to vector<2x32xf32>
      %cst_89 = arith.constant 1.600000e+01 : f32
      %347 = vector.broadcast %cst_89 : f32 to vector<2x32xf32>
      %348 = arith.divf %346, %347 : vector<2x32xf32>
      %c0_90 = arith.constant 0 : index
      %c0_91 = arith.constant 0 : index
      %349 = vector.load %arg6[%c0_90, %c0_91] : memref<2x32xf32, #tpu.memory_space<vmem>>, vector<2x32xf32>
      tpu.vector_store %arg6[%c0_90, %c0_91], %348 {strides = array<i32>} : memref<2x32xf32, #tpu.memory_space<vmem>>, vector<2x32xf32>,
      %c0_92 = arith.constant 0 : index
      %c0_93 = arith.constant 0 : index
      %350 = vector.load %arg7[%c0_92, %c0_93] : memref<2x32xf32, #tpu.memory_space<vmem>>, vector<2x32xf32>
      tpu.vector_store %arg7[%c0_92, %c0_93], %348 {strides = array<i32>} : memref<2x32xf32, #tpu.memory_space<vmem>>, vector<2x32xf32>,
    } else {
    }
    %c0_7 = arith.constant 0 : index
    %c0_8 = arith.constant 0 : index
    %6 = vector.load %arg6[%c0_7, %c0_8] : memref<2x32xf32, #tpu.memory_space<vmem>>, vector<2x32xf32>
    %c0_9 = arith.constant 0 : index
    %c0_10 = arith.constant 0 : index
    %7 = vector.load %arg7[%c0_9, %c0_10] : memref<2x32xf32, #tpu.memory_space<vmem>>, vector<2x32xf32>
    %c0_11 = arith.constant 0 : index
    %c0_12 = arith.constant 0 : index
    %8 = vector.load %arg1[%c0_11, %c0_12] : memref<2x32xf32, #tpu.memory_space<vmem>>, vector<2x4xf32>
    %9 = vector.shape_cast %6 : vector<2x32xf32> to vector<2x32x1xf32>
    %10 = vector.broadcast %9 : vector<2x32x1xf32> to vector<2x32x16xf32>
    %11 = arith.mulf %10, %0 : vector<2x32x16xf32>
    %cst = arith.constant dense<0.000000e+00> : vector<2x16xf32>
    %12 = vector.multi_reduction <add>, %11, %cst [1] : vector<2x32x16xf32> to vector<2x16xf32>
    %cst_13 = arith.constant 0.176776692 : f32
    %13 = vector.broadcast %cst_13 : f32 to vector<2x16xf32>
    %14 = arith.mulf %12, %13 : vector<2x16xf32>
    %cst_14 = arith.constant dense<0xFF800000> : vector<2xf32>
    %15 = vector.multi_reduction <maximumf>, %14, %cst_14 [1] : vector<2x16xf32> to vector<2xf32>
    %16 = vector.shape_cast %15 : vector<2xf32> to vector<2x1xf32>
    %17 = vector.broadcast %16 : vector<2x1xf32> to vector<2x16xf32>
    %18 = arith.subf %14, %17 : vector<2x16xf32>
    %19 = math.exp %18 : vector<2x16xf32>
    %cst_15 = arith.constant dense<0.000000e+00> : vector<2xf32>
    %20 = vector.multi_reduction <add>, %19, %cst_15 [1] : vector<2x16xf32> to vector<2xf32>
    %21 = vector.shape_cast %20 : vector<2xf32> to vector<2x1xf32>
    %22 = tpu.reciprocal %21 : vector<2x1xf32> -> vector<2x1xf32>
    %23 = vector.broadcast %22 : vector<2x1xf32> to vector<2x16xf32>
    %24 = arith.mulf %19, %23 : vector<2x16xf32>
    %25 = vector.shape_cast %24 : vector<2x16xf32> to vector<2x1x16xf32>
    %26 = vector.broadcast %25 : vector<2x1x16xf32> to vector<2x32x16xf32>
    %27 = arith.mulf %0, %26 : vector<2x32x16xf32>
    %cst_16 = arith.constant dense<0.000000e+00> : vector<2x32xf32>
    %28 = vector.multi_reduction <add>, %27, %cst_16 [2] : vector<2x32x16xf32> to vector<2x32xf32>
    %29 = tpu.concatenate %8, %6, %28 in 1 : vector<2x4xf32>, vector<2x32xf32>, vector<2x32xf32> -> vector<2x68xf32>
    %cst_17 = arith.constant dense<0.000000e+00> : vector<2x128xf32>
    %30 = tpu.matmul %29, %1, %cst_17 {dimension_numbers = #tpu.dot_dimension_numbers<[1], [0], [0], [1], [0, 0, 1, 1], [], []>} : vector<2x68xf32>, vector<68x128xf32>, vector<2x128xf32> -> vector<2x128xf32>
    %31 = vector.broadcast %2 : vector<1x128xf32> to vector<2x128xf32>
    %32 = arith.addf %30, %31 : vector<2x128xf32>
    %33 = vector.extract_strided_slice %32 {offsets = [0, 0], sizes = [2, 96], strides = [1, 1]} : vector<2x128xf32> to vector<2x96xf32>
    %34 = arith.negf %33 : vector<2x96xf32>
    %35 = math.exp %34 : vector<2x96xf32>
    %cst_18 = arith.constant 1.000000e+00 : f32
    %36 = vector.broadcast %cst_18 : f32 to vector<2x96xf32>
    %37 = arith.addf %36, %35 : vector<2x96xf32>
    %38 = arith.divf %36, %37 : vector<2x96xf32>
    %39 = vector.extract_strided_slice %32 {offsets = [0, 96], sizes = [2, 32], strides = [1, 1]} : vector<2x128xf32> to vector<2x32xf32>
    %40 = math.tanh %39 : vector<2x32xf32>
    %41 = vector.extract_strided_slice %38 {offsets = [0, 0], sizes = [2, 32], strides = [1, 1]} : vector<2x96xf32> to vector<2x32xf32>
    %42 = vector.extract_strided_slice %38 {offsets = [0, 32], sizes = [2, 32], strides = [1, 1]} : vector<2x96xf32> to vector<2x32xf32>
    %43 = vector.extract_strided_slice %38 {offsets = [0, 64], sizes = [2, 32], strides = [1, 1]} : vector<2x96xf32> to vector<2x32xf32>
    %44 = arith.mulf %42, %7 : vector<2x32xf32>
    %45 = arith.mulf %41, %40 : vector<2x32xf32>
    %46 = arith.addf %44, %45 : vector<2x32xf32>
    %47 = math.tanh %46 : vector<2x32xf32>
    %48 = arith.mulf %43, %47 : vector<2x32xf32>
    %c0_19 = arith.constant 0 : index
    %c0_20 = arith.constant 0 : index
    %49 = vector.load %arg5[%c0_19, %c0_20] : memref<2x256xf32, #tpu.memory_space<vmem>>, vector<2x32xf32>
    tpu.vector_store %arg5[%c0_19, %c0_20], %48 {strides = array<i32>} : memref<2x256xf32, #tpu.memory_space<vmem>>, vector<2x32xf32>,
    %c0_21 = arith.constant 0 : index
    %c4 = arith.constant 4 : index
    %50 = vector.load %arg1[%c0_21, %c4] : memref<2x32xf32, #tpu.memory_space<vmem>>, vector<2x4xf32>
    %51 = vector.shape_cast %48 : vector<2x32xf32> to vector<2x32x1xf32>
    %52 = vector.broadcast %51 : vector<2x32x1xf32> to vector<2x32x16xf32>
    %53 = arith.mulf %52, %0 : vector<2x32x16xf32>
    %cst_22 = arith.constant dense<0.000000e+00> : vector<2x16xf32>
    %54 = vector.multi_reduction <add>, %53, %cst_22 [1] : vector<2x32x16xf32> to vector<2x16xf32>
    %cst_23 = arith.constant 0.176776692 : f32
    %55 = vector.broadcast %cst_23 : f32 to vector<2x16xf32>
    %56 = arith.mulf %54, %55 : vector<2x16xf32>
    %cst_24 = arith.constant dense<0xFF800000> : vector<2xf32>
    %57 = vector.multi_reduction <maximumf>, %56, %cst_24 [1] : vector<2x16xf32> to vector<2xf32>
    %58 = vector.shape_cast %57 : vector<2xf32> to vector<2x1xf32>
    %59 = vector.broadcast %58 : vector<2x1xf32> to vector<2x16xf32>
    %60 = arith.subf %56, %59 : vector<2x16xf32>
    %61 = math.exp %60 : vector<2x16xf32>
    %cst_25 = arith.constant dense<0.000000e+00> : vector<2xf32>
    %62 = vector.multi_reduction <add>, %61, %cst_25 [1] : vector<2x16xf32> to vector<2xf32>
    %63 = vector.shape_cast %62 : vector<2xf32> to vector<2x1xf32>
    %64 = tpu.reciprocal %63 : vector<2x1xf32> -> vector<2x1xf32>
    %65 = vector.broadcast %64 : vector<2x1xf32> to vector<2x16xf32>
    %66 = arith.mulf %61, %65 : vector<2x16xf32>
    %67 = vector.shape_cast %66 : vector<2x16xf32> to vector<2x1x16xf32>
    %68 = vector.broadcast %67 : vector<2x1x16xf32> to vector<2x32x16xf32>
    %69 = arith.mulf %0, %68 : vector<2x32x16xf32>
    %cst_26 = arith.constant dense<0.000000e+00> : vector<2x32xf32>
    %70 = vector.multi_reduction <add>, %69, %cst_26 [2] : vector<2x32x16xf32> to vector<2x32xf32>
    %71 = tpu.concatenate %50, %48, %70 in 1 : vector<2x4xf32>, vector<2x32xf32>, vector<2x32xf32> -> vector<2x68xf32>
    %cst_27 = arith.constant dense<0.000000e+00> : vector<2x128xf32>
    %72 = tpu.matmul %71, %1, %cst_27 {dimension_numbers = #tpu.dot_dimension_numbers<[1], [0], [0], [1], [0, 0, 1, 1], [], []>} : vector<2x68xf32>, vector<68x128xf32>, vector<2x128xf32> -> vector<2x128xf32>
    %73 = vector.broadcast %2 : vector<1x128xf32> to vector<2x128xf32>
    %74 = arith.addf %72, %73 : vector<2x128xf32>
    %75 = vector.extract_strided_slice %74 {offsets = [0, 0], sizes = [2, 96], strides = [1, 1]} : vector<2x128xf32> to vector<2x96xf32>
    %76 = arith.negf %75 : vector<2x96xf32>
    %77 = math.exp %76 : vector<2x96xf32>
    %cst_28 = arith.constant 1.000000e+00 : f32
    %78 = vector.broadcast %cst_28 : f32 to vector<2x96xf32>
    %79 = arith.addf %78, %77 : vector<2x96xf32>
    %80 = arith.divf %78, %79 : vector<2x96xf32>
    %81 = vector.extract_strided_slice %74 {offsets = [0, 96], sizes = [2, 32], strides = [1, 1]} : vector<2x128xf32> to vector<2x32xf32>
    %82 = math.tanh %81 : vector<2x32xf32>
    %83 = vector.extract_strided_slice %80 {offsets = [0, 0], sizes = [2, 32], strides = [1, 1]} : vector<2x96xf32> to vector<2x32xf32>
    %84 = vector.extract_strided_slice %80 {offsets = [0, 32], sizes = [2, 32], strides = [1, 1]} : vector<2x96xf32> to vector<2x32xf32>
    %85 = vector.extract_strided_slice %80 {offsets = [0, 64], sizes = [2, 32], strides = [1, 1]} : vector<2x96xf32> to vector<2x32xf32>
    %86 = arith.mulf %84, %46 : vector<2x32xf32>
    %87 = arith.mulf %83, %82 : vector<2x32xf32>
    %88 = arith.addf %86, %87 : vector<2x32xf32>
    %89 = math.tanh %88 : vector<2x32xf32>
    %90 = arith.mulf %85, %89 : vector<2x32xf32>
    %c0_29 = arith.constant 0 : index
    %c32 = arith.constant 32 : index
    %91 = vector.load %arg5[%c0_29, %c32] : memref<2x256xf32, #tpu.memory_space<vmem>>, vector<2x32xf32>
    tpu.vector_store %arg5[%c0_29, %c32], %90 {strides = array<i32>} : memref<2x256xf32, #tpu.memory_space<vmem>>, vector<2x32xf32>,
    %c0_30 = arith.constant 0 : index
    %c8 = arith.constant 8 : index
    %92 = vector.load %arg1[%c0_30, %c8] : memref<2x32xf32, #tpu.memory_space<vmem>>, vector<2x4xf32>
    %93 = vector.shape_cast %90 : vector<2x32xf32> to vector<2x32x1xf32>
    %94 = vector.broadcast %93 : vector<2x32x1xf32> to vector<2x32x16xf32>
    %95 = arith.mulf %94, %0 : vector<2x32x16xf32>
    %cst_31 = arith.constant dense<0.000000e+00> : vector<2x16xf32>
    %96 = vector.multi_reduction <add>, %95, %cst_31 [1] : vector<2x32x16xf32> to vector<2x16xf32>
    %cst_32 = arith.constant 0.176776692 : f32
    %97 = vector.broadcast %cst_32 : f32 to vector<2x16xf32>
    %98 = arith.mulf %96, %97 : vector<2x16xf32>
    %cst_33 = arith.constant dense<0xFF800000> : vector<2xf32>
    %99 = vector.multi_reduction <maximumf>, %98, %cst_33 [1] : vector<2x16xf32> to vector<2xf32>
    %100 = vector.shape_cast %99 : vector<2xf32> to vector<2x1xf32>
    %101 = vector.broadcast %100 : vector<2x1xf32> to vector<2x16xf32>
    %102 = arith.subf %98, %101 : vector<2x16xf32>
    %103 = math.exp %102 : vector<2x16xf32>
    %cst_34 = arith.constant dense<0.000000e+00> : vector<2xf32>
    %104 = vector.multi_reduction <add>, %103, %cst_34 [1] : vector<2x16xf32> to vector<2xf32>
    %105 = vector.shape_cast %104 : vector<2xf32> to vector<2x1xf32>
    %106 = tpu.reciprocal %105 : vector<2x1xf32> -> vector<2x1xf32>
    %107 = vector.broadcast %106 : vector<2x1xf32> to vector<2x16xf32>
    %108 = arith.mulf %103, %107 : vector<2x16xf32>
    %109 = vector.shape_cast %108 : vector<2x16xf32> to vector<2x1x16xf32>
    %110 = vector.broadcast %109 : vector<2x1x16xf32> to vector<2x32x16xf32>
    %111 = arith.mulf %0, %110 : vector<2x32x16xf32>
    %cst_35 = arith.constant dense<0.000000e+00> : vector<2x32xf32>
    %112 = vector.multi_reduction <add>, %111, %cst_35 [2] : vector<2x32x16xf32> to vector<2x32xf32>
    %113 = tpu.concatenate %92, %90, %112 in 1 : vector<2x4xf32>, vector<2x32xf32>, vector<2x32xf32> -> vector<2x68xf32>
    %cst_36 = arith.constant dense<0.000000e+00> : vector<2x128xf32>
    %114 = tpu.matmul %113, %1, %cst_36 {dimension_numbers = #tpu.dot_dimension_numbers<[1], [0], [0], [1], [0, 0, 1, 1], [], []>} : vector<2x68xf32>, vector<68x128xf32>, vector<2x128xf32> -> vector<2x128xf32>
    %115 = vector.broadcast %2 : vector<1x128xf32> to vector<2x128xf32>
    %116 = arith.addf %114, %115 : vector<2x128xf32>
    %117 = vector.extract_strided_slice %116 {offsets = [0, 0], sizes = [2, 96], strides = [1, 1]} : vector<2x128xf32> to vector<2x96xf32>
    %118 = arith.negf %117 : vector<2x96xf32>
    %119 = math.exp %118 : vector<2x96xf32>
    %cst_37 = arith.constant 1.000000e+00 : f32
    %120 = vector.broadcast %cst_37 : f32 to vector<2x96xf32>
    %121 = arith.addf %120, %119 : vector<2x96xf32>
    %122 = arith.divf %120, %121 : vector<2x96xf32>
    %123 = vector.extract_strided_slice %116 {offsets = [0, 96], sizes = [2, 32], strides = [1, 1]} : vector<2x128xf32> to vector<2x32xf32>
    %124 = math.tanh %123 : vector<2x32xf32>
    %125 = vector.extract_strided_slice %122 {offsets = [0, 0], sizes = [2, 32], strides = [1, 1]} : vector<2x96xf32> to vector<2x32xf32>
    %126 = vector.extract_strided_slice %122 {offsets = [0, 32], sizes = [2, 32], strides = [1, 1]} : vector<2x96xf32> to vector<2x32xf32>
    %127 = vector.extract_strided_slice %122 {offsets = [0, 64], sizes = [2, 32], strides = [1, 1]} : vector<2x96xf32> to vector<2x32xf32>
    %128 = arith.mulf %126, %88 : vector<2x32xf32>
    %129 = arith.mulf %125, %124 : vector<2x32xf32>
    %130 = arith.addf %128, %129 : vector<2x32xf32>
    %131 = math.tanh %130 : vector<2x32xf32>
    %132 = arith.mulf %127, %131 : vector<2x32xf32>
    %c0_38 = arith.constant 0 : index
    %c64 = arith.constant 64 : index
    %133 = vector.load %arg5[%c0_38, %c64] : memref<2x256xf32, #tpu.memory_space<vmem>>, vector<2x32xf32>
    tpu.vector_store %arg5[%c0_38, %c64], %132 {strides = array<i32>} : memref<2x256xf32, #tpu.memory_space<vmem>>, vector<2x32xf32>,
    %c0_39 = arith.constant 0 : index
    %c12 = arith.constant 12 : index
    %134 = vector.load %arg1[%c0_39, %c12] : memref<2x32xf32, #tpu.memory_space<vmem>>, vector<2x4xf32>
    %135 = vector.shape_cast %132 : vector<2x32xf32> to vector<2x32x1xf32>
    %136 = vector.broadcast %135 : vector<2x32x1xf32> to vector<2x32x16xf32>
    %137 = arith.mulf %136, %0 : vector<2x32x16xf32>
    %cst_40 = arith.constant dense<0.000000e+00> : vector<2x16xf32>
    %138 = vector.multi_reduction <add>, %137, %cst_40 [1] : vector<2x32x16xf32> to vector<2x16xf32>
    %cst_41 = arith.constant 0.176776692 : f32
    %139 = vector.broadcast %cst_41 : f32 to vector<2x16xf32>
    %140 = arith.mulf %138, %139 : vector<2x16xf32>
    %cst_42 = arith.constant dense<0xFF800000> : vector<2xf32>
    %141 = vector.multi_reduction <maximumf>, %140, %cst_42 [1] : vector<2x16xf32> to vector<2xf32>
    %142 = vector.shape_cast %141 : vector<2xf32> to vector<2x1xf32>
    %143 = vector.broadcast %142 : vector<2x1xf32> to vector<2x16xf32>
    %144 = arith.subf %140, %143 : vector<2x16xf32>
    %145 = math.exp %144 : vector<2x16xf32>
    %cst_43 = arith.constant dense<0.000000e+00> : vector<2xf32>
    %146 = vector.multi_reduction <add>, %145, %cst_43 [1] : vector<2x16xf32> to vector<2xf32>
    %147 = vector.shape_cast %146 : vector<2xf32> to vector<2x1xf32>
    %148 = tpu.reciprocal %147 : vector<2x1xf32> -> vector<2x1xf32>
    %149 = vector.broadcast %148 : vector<2x1xf32> to vector<2x16xf32>
    %150 = arith.mulf %145, %149 : vector<2x16xf32>
    %151 = vector.shape_cast %150 : vector<2x16xf32> to vector<2x1x16xf32>
    %152 = vector.broadcast %151 : vector<2x1x16xf32> to vector<2x32x16xf32>
    %153 = arith.mulf %0, %152 : vector<2x32x16xf32>
    %cst_44 = arith.constant dense<0.000000e+00> : vector<2x32xf32>
    %154 = vector.multi_reduction <add>, %153, %cst_44 [2] : vector<2x32x16xf32> to vector<2x32xf32>
    %155 = tpu.concatenate %134, %132, %154 in 1 : vector<2x4xf32>, vector<2x32xf32>, vector<2x32xf32> -> vector<2x68xf32>
    %cst_45 = arith.constant dense<0.000000e+00> : vector<2x128xf32>
    %156 = tpu.matmul %155, %1, %cst_45 {dimension_numbers = #tpu.dot_dimension_numbers<[1], [0], [0], [1], [0, 0, 1, 1], [], []>} : vector<2x68xf32>, vector<68x128xf32>, vector<2x128xf32> -> vector<2x128xf32>
    %157 = vector.broadcast %2 : vector<1x128xf32> to vector<2x128xf32>
    %158 = arith.addf %156, %157 : vector<2x128xf32>
    %159 = vector.extract_strided_slice %158 {offsets = [0, 0], sizes = [2, 96], strides = [1, 1]} : vector<2x128xf32> to vector<2x96xf32>
    %160 = arith.negf %159 : vector<2x96xf32>
    %161 = math.exp %160 : vector<2x96xf32>
    %cst_46 = arith.constant 1.000000e+00 : f32
    %162 = vector.broadcast %cst_46 : f32 to vector<2x96xf32>
    %163 = arith.addf %162, %161 : vector<2x96xf32>
    %164 = arith.divf %162, %163 : vector<2x96xf32>
    %165 = vector.extract_strided_slice %158 {offsets = [0, 96], sizes = [2, 32], strides = [1, 1]} : vector<2x128xf32> to vector<2x32xf32>
    %166 = math.tanh %165 : vector<2x32xf32>
    %167 = vector.extract_strided_slice %164 {offsets = [0, 0], sizes = [2, 32], strides = [1, 1]} : vector<2x96xf32> to vector<2x32xf32>
    %168 = vector.extract_strided_slice %164 {offsets = [0, 32], sizes = [2, 32], strides = [1, 1]} : vector<2x96xf32> to vector<2x32xf32>
    %169 = vector.extract_strided_slice %164 {offsets = [0, 64], sizes = [2, 32], strides = [1, 1]} : vector<2x96xf32> to vector<2x32xf32>
    %170 = arith.mulf %168, %130 : vector<2x32xf32>
    %171 = arith.mulf %167, %166 : vector<2x32xf32>
    %172 = arith.addf %170, %171 : vector<2x32xf32>
    %173 = math.tanh %172 : vector<2x32xf32>
    %174 = arith.mulf %169, %173 : vector<2x32xf32>
    %c0_47 = arith.constant 0 : index
    %c96 = arith.constant 96 : index
    %175 = vector.load %arg5[%c0_47, %c96] : memref<2x256xf32, #tpu.memory_space<vmem>>, vector<2x32xf32>
    tpu.vector_store %arg5[%c0_47, %c96], %174 {strides = array<i32>} : memref<2x256xf32, #tpu.memory_space<vmem>>, vector<2x32xf32>,
    %c0_48 = arith.constant 0 : index
    %c16 = arith.constant 16 : index
    %176 = vector.load %arg1[%c0_48, %c16] : memref<2x32xf32, #tpu.memory_space<vmem>>, vector<2x4xf32>
    %177 = vector.shape_cast %174 : vector<2x32xf32> to vector<2x32x1xf32>
    %178 = vector.broadcast %177 : vector<2x32x1xf32> to vector<2x32x16xf32>
    %179 = arith.mulf %178, %0 : vector<2x32x16xf32>
    %cst_49 = arith.constant dense<0.000000e+00> : vector<2x16xf32>
    %180 = vector.multi_reduction <add>, %179, %cst_49 [1] : vector<2x32x16xf32> to vector<2x16xf32>
    %cst_50 = arith.constant 0.176776692 : f32
    %181 = vector.broadcast %cst_50 : f32 to vector<2x16xf32>
    %182 = arith.mulf %180, %181 : vector<2x16xf32>
    %cst_51 = arith.constant dense<0xFF800000> : vector<2xf32>
    %183 = vector.multi_reduction <maximumf>, %182, %cst_51 [1] : vector<2x16xf32> to vector<2xf32>
    %184 = vector.shape_cast %183 : vector<2xf32> to vector<2x1xf32>
    %185 = vector.broadcast %184 : vector<2x1xf32> to vector<2x16xf32>
    %186 = arith.subf %182, %185 : vector<2x16xf32>
    %187 = math.exp %186 : vector<2x16xf32>
    %cst_52 = arith.constant dense<0.000000e+00> : vector<2xf32>
    %188 = vector.multi_reduction <add>, %187, %cst_52 [1] : vector<2x16xf32> to vector<2xf32>
    %189 = vector.shape_cast %188 : vector<2xf32> to vector<2x1xf32>
    %190 = tpu.reciprocal %189 : vector<2x1xf32> -> vector<2x1xf32>
    %191 = vector.broadcast %190 : vector<2x1xf32> to vector<2x16xf32>
    %192 = arith.mulf %187, %191 : vector<2x16xf32>
    %193 = vector.shape_cast %192 : vector<2x16xf32> to vector<2x1x16xf32>
    %194 = vector.broadcast %193 : vector<2x1x16xf32> to vector<2x32x16xf32>
    %195 = arith.mulf %0, %194 : vector<2x32x16xf32>
    %cst_53 = arith.constant dense<0.000000e+00> : vector<2x32xf32>
    %196 = vector.multi_reduction <add>, %195, %cst_53 [2] : vector<2x32x16xf32> to vector<2x32xf32>
    %197 = tpu.concatenate %176, %174, %196 in 1 : vector<2x4xf32>, vector<2x32xf32>, vector<2x32xf32> -> vector<2x68xf32>
    %cst_54 = arith.constant dense<0.000000e+00> : vector<2x128xf32>
    %198 = tpu.matmul %197, %1, %cst_54 {dimension_numbers = #tpu.dot_dimension_numbers<[1], [0], [0], [1], [0, 0, 1, 1], [], []>} : vector<2x68xf32>, vector<68x128xf32>, vector<2x128xf32> -> vector<2x128xf32>
    %199 = vector.broadcast %2 : vector<1x128xf32> to vector<2x128xf32>
    %200 = arith.addf %198, %199 : vector<2x128xf32>
    %201 = vector.extract_strided_slice %200 {offsets = [0, 0], sizes = [2, 96], strides = [1, 1]} : vector<2x128xf32> to vector<2x96xf32>
    %202 = arith.negf %201 : vector<2x96xf32>
    %203 = math.exp %202 : vector<2x96xf32>
    %cst_55 = arith.constant 1.000000e+00 : f32
    %204 = vector.broadcast %cst_55 : f32 to vector<2x96xf32>
    %205 = arith.addf %204, %203 : vector<2x96xf32>
    %206 = arith.divf %204, %205 : vector<2x96xf32>
    %207 = vector.extract_strided_slice %200 {offsets = [0, 96], sizes = [2, 32], strides = [1, 1]} : vector<2x128xf32> to vector<2x32xf32>
    %208 = math.tanh %207 : vector<2x32xf32>
    %209 = vector.extract_strided_slice %206 {offsets = [0, 0], sizes = [2, 32], strides = [1, 1]} : vector<2x96xf32> to vector<2x32xf32>
    %210 = vector.extract_strided_slice %206 {offsets = [0, 32], sizes = [2, 32], strides = [1, 1]} : vector<2x96xf32> to vector<2x32xf32>
    %211 = vector.extract_strided_slice %206 {offsets = [0, 64], sizes = [2, 32], strides = [1, 1]} : vector<2x96xf32> to vector<2x32xf32>
    %212 = arith.mulf %210, %172 : vector<2x32xf32>
    %213 = arith.mulf %209, %208 : vector<2x32xf32>
    %214 = arith.addf %212, %213 : vector<2x32xf32>
    %215 = math.tanh %214 : vector<2x32xf32>
    %216 = arith.mulf %211, %215 : vector<2x32xf32>
    %c0_56 = arith.constant 0 : index
    %c128 = arith.constant 128 : index
    %217 = vector.load %arg5[%c0_56, %c128] : memref<2x256xf32, #tpu.memory_space<vmem>>, vector<2x32xf32>
    tpu.vector_store %arg5[%c0_56, %c128], %216 {strides = array<i32>} : memref<2x256xf32, #tpu.memory_space<vmem>>, vector<2x32xf32>,
    %c0_57 = arith.constant 0 : index
    %c20 = arith.constant 20 : index
    %218 = vector.load %arg1[%c0_57, %c20] : memref<2x32xf32, #tpu.memory_space<vmem>>, vector<2x4xf32>
    %219 = vector.shape_cast %216 : vector<2x32xf32> to vector<2x32x1xf32>
    %220 = vector.broadcast %219 : vector<2x32x1xf32> to vector<2x32x16xf32>
    %221 = arith.mulf %220, %0 : vector<2x32x16xf32>
    %cst_58 = arith.constant dense<0.000000e+00> : vector<2x16xf32>
    %222 = vector.multi_reduction <add>, %221, %cst_58 [1] : vector<2x32x16xf32> to vector<2x16xf32>
    %cst_59 = arith.constant 0.176776692 : f32
    %223 = vector.broadcast %cst_59 : f32 to vector<2x16xf32>
    %224 = arith.mulf %222, %223 : vector<2x16xf32>
    %cst_60 = arith.constant dense<0xFF800000> : vector<2xf32>
    %225 = vector.multi_reduction <maximumf>, %224, %cst_60 [1] : vector<2x16xf32> to vector<2xf32>
    %226 = vector.shape_cast %225 : vector<2xf32> to vector<2x1xf32>
    %227 = vector.broadcast %226 : vector<2x1xf32> to vector<2x16xf32>
    %228 = arith.subf %224, %227 : vector<2x16xf32>
    %229 = math.exp %228 : vector<2x16xf32>
    %cst_61 = arith.constant dense<0.000000e+00> : vector<2xf32>
    %230 = vector.multi_reduction <add>, %229, %cst_61 [1] : vector<2x16xf32> to vector<2xf32>
    %231 = vector.shape_cast %230 : vector<2xf32> to vector<2x1xf32>
    %232 = tpu.reciprocal %231 : vector<2x1xf32> -> vector<2x1xf32>
    %233 = vector.broadcast %232 : vector<2x1xf32> to vector<2x16xf32>
    %234 = arith.mulf %229, %233 : vector<2x16xf32>
    %235 = vector.shape_cast %234 : vector<2x16xf32> to vector<2x1x16xf32>
    %236 = vector.broadcast %235 : vector<2x1x16xf32> to vector<2x32x16xf32>
    %237 = arith.mulf %0, %236 : vector<2x32x16xf32>
    %cst_62 = arith.constant dense<0.000000e+00> : vector<2x32xf32>
    %238 = vector.multi_reduction <add>, %237, %cst_62 [2] : vector<2x32x16xf32> to vector<2x32xf32>
    %239 = tpu.concatenate %218, %216, %238 in 1 : vector<2x4xf32>, vector<2x32xf32>, vector<2x32xf32> -> vector<2x68xf32>
    %cst_63 = arith.constant dense<0.000000e+00> : vector<2x128xf32>
    %240 = tpu.matmul %239, %1, %cst_63 {dimension_numbers = #tpu.dot_dimension_numbers<[1], [0], [0], [1], [0, 0, 1, 1], [], []>} : vector<2x68xf32>, vector<68x128xf32>, vector<2x128xf32> -> vector<2x128xf32>
    %241 = vector.broadcast %2 : vector<1x128xf32> to vector<2x128xf32>
    %242 = arith.addf %240, %241 : vector<2x128xf32>
    %243 = vector.extract_strided_slice %242 {offsets = [0, 0], sizes = [2, 96], strides = [1, 1]} : vector<2x128xf32> to vector<2x96xf32>
    %244 = arith.negf %243 : vector<2x96xf32>
    %245 = math.exp %244 : vector<2x96xf32>
    %cst_64 = arith.constant 1.000000e+00 : f32
    %246 = vector.broadcast %cst_64 : f32 to vector<2x96xf32>
    %247 = arith.addf %246, %245 : vector<2x96xf32>
    %248 = arith.divf %246, %247 : vector<2x96xf32>
    %249 = vector.extract_strided_slice %242 {offsets = [0, 96], sizes = [2, 32], strides = [1, 1]} : vector<2x128xf32> to vector<2x32xf32>
    %250 = math.tanh %249 : vector<2x32xf32>
    %251 = vector.extract_strided_slice %248 {offsets = [0, 0], sizes = [2, 32], strides = [1, 1]} : vector<2x96xf32> to vector<2x32xf32>
    %252 = vector.extract_strided_slice %248 {offsets = [0, 32], sizes = [2, 32], strides = [1, 1]} : vector<2x96xf32> to vector<2x32xf32>
    %253 = vector.extract_strided_slice %248 {offsets = [0, 64], sizes = [2, 32], strides = [1, 1]} : vector<2x96xf32> to vector<2x32xf32>
    %254 = arith.mulf %252, %214 : vector<2x32xf32>
    %255 = arith.mulf %251, %250 : vector<2x32xf32>
    %256 = arith.addf %254, %255 : vector<2x32xf32>
    %257 = math.tanh %256 : vector<2x32xf32>
    %258 = arith.mulf %253, %257 : vector<2x32xf32>
    %c0_65 = arith.constant 0 : index
    %c160 = arith.constant 160 : index
    %259 = vector.load %arg5[%c0_65, %c160] : memref<2x256xf32, #tpu.memory_space<vmem>>, vector<2x32xf32>
    tpu.vector_store %arg5[%c0_65, %c160], %258 {strides = array<i32>} : memref<2x256xf32, #tpu.memory_space<vmem>>, vector<2x32xf32>,
    %c0_66 = arith.constant 0 : index
    %c24 = arith.constant 24 : index
    %260 = vector.load %arg1[%c0_66, %c24] : memref<2x32xf32, #tpu.memory_space<vmem>>, vector<2x4xf32>
    %261 = vector.shape_cast %258 : vector<2x32xf32> to vector<2x32x1xf32>
    %262 = vector.broadcast %261 : vector<2x32x1xf32> to vector<2x32x16xf32>
    %263 = arith.mulf %262, %0 : vector<2x32x16xf32>
    %cst_67 = arith.constant dense<0.000000e+00> : vector<2x16xf32>
    %264 = vector.multi_reduction <add>, %263, %cst_67 [1] : vector<2x32x16xf32> to vector<2x16xf32>
    %cst_68 = arith.constant 0.176776692 : f32
    %265 = vector.broadcast %cst_68 : f32 to vector<2x16xf32>
    %266 = arith.mulf %264, %265 : vector<2x16xf32>
    %cst_69 = arith.constant dense<0xFF800000> : vector<2xf32>
    %267 = vector.multi_reduction <maximumf>, %266, %cst_69 [1] : vector<2x16xf32> to vector<2xf32>
    %268 = vector.shape_cast %267 : vector<2xf32> to vector<2x1xf32>
    %269 = vector.broadcast %268 : vector<2x1xf32> to vector<2x16xf32>
    %270 = arith.subf %266, %269 : vector<2x16xf32>
    %271 = math.exp %270 : vector<2x16xf32>
    %cst_70 = arith.constant dense<0.000000e+00> : vector<2xf32>
    %272 = vector.multi_reduction <add>, %271, %cst_70 [1] : vector<2x16xf32> to vector<2xf32>
    %273 = vector.shape_cast %272 : vector<2xf32> to vector<2x1xf32>
    %274 = tpu.reciprocal %273 : vector<2x1xf32> -> vector<2x1xf32>
    %275 = vector.broadcast %274 : vector<2x1xf32> to vector<2x16xf32>
    %276 = arith.mulf %271, %275 : vector<2x16xf32>
    %277 = vector.shape_cast %276 : vector<2x16xf32> to vector<2x1x16xf32>
    %278 = vector.broadcast %277 : vector<2x1x16xf32> to vector<2x32x16xf32>
    %279 = arith.mulf %0, %278 : vector<2x32x16xf32>
    %cst_71 = arith.constant dense<0.000000e+00> : vector<2x32xf32>
    %280 = vector.multi_reduction <add>, %279, %cst_71 [2] : vector<2x32x16xf32> to vector<2x32xf32>
    %281 = tpu.concatenate %260, %258, %280 in 1 : vector<2x4xf32>, vector<2x32xf32>, vector<2x32xf32> -> vector<2x68xf32>
    %cst_72 = arith.constant dense<0.000000e+00> : vector<2x128xf32>
    %282 = tpu.matmul %281, %1, %cst_72 {dimension_numbers = #tpu.dot_dimension_numbers<[1], [0], [0], [1], [0, 0, 1, 1], [], []>} : vector<2x68xf32>, vector<68x128xf32>, vector<2x128xf32> -> vector<2x128xf32>
    %283 = vector.broadcast %2 : vector<1x128xf32> to vector<2x128xf32>
    %284 = arith.addf %282, %283 : vector<2x128xf32>
    %285 = vector.extract_strided_slice %284 {offsets = [0, 0], sizes = [2, 96], strides = [1, 1]} : vector<2x128xf32> to vector<2x96xf32>
    %286 = arith.negf %285 : vector<2x96xf32>
    %287 = math.exp %286 : vector<2x96xf32>
    %cst_73 = arith.constant 1.000000e+00 : f32
    %288 = vector.broadcast %cst_73 : f32 to vector<2x96xf32>
    %289 = arith.addf %288, %287 : vector<2x96xf32>
    %290 = arith.divf %288, %289 : vector<2x96xf32>
    %291 = vector.extract_strided_slice %284 {offsets = [0, 96], sizes = [2, 32], strides = [1, 1]} : vector<2x128xf32> to vector<2x32xf32>
    %292 = math.tanh %291 : vector<2x32xf32>
    %293 = vector.extract_strided_slice %290 {offsets = [0, 0], sizes = [2, 32], strides = [1, 1]} : vector<2x96xf32> to vector<2x32xf32>
    %294 = vector.extract_strided_slice %290 {offsets = [0, 32], sizes = [2, 32], strides = [1, 1]} : vector<2x96xf32> to vector<2x32xf32>
    %295 = vector.extract_strided_slice %290 {offsets = [0, 64], sizes = [2, 32], strides = [1, 1]} : vector<2x96xf32> to vector<2x32xf32>
    %296 = arith.mulf %294, %256 : vector<2x32xf32>
    %297 = arith.mulf %293, %292 : vector<2x32xf32>
    %298 = arith.addf %296, %297 : vector<2x32xf32>
    %299 = math.tanh %298 : vector<2x32xf32>
    %300 = arith.mulf %295, %299 : vector<2x32xf32>
    %c0_74 = arith.constant 0 : index
    %c192 = arith.constant 192 : index
    %301 = vector.load %arg5[%c0_74, %c192] : memref<2x256xf32, #tpu.memory_space<vmem>>, vector<2x32xf32>
    tpu.vector_store %arg5[%c0_74, %c192], %300 {strides = array<i32>} : memref<2x256xf32, #tpu.memory_space<vmem>>, vector<2x32xf32>,
    %c0_75 = arith.constant 0 : index
    %c28 = arith.constant 28 : index
    %302 = vector.load %arg1[%c0_75, %c28] : memref<2x32xf32, #tpu.memory_space<vmem>>, vector<2x4xf32>
    %303 = vector.shape_cast %300 : vector<2x32xf32> to vector<2x32x1xf32>
    %304 = vector.broadcast %303 : vector<2x32x1xf32> to vector<2x32x16xf32>
    %305 = arith.mulf %304, %0 : vector<2x32x16xf32>
    %cst_76 = arith.constant dense<0.000000e+00> : vector<2x16xf32>
    %306 = vector.multi_reduction <add>, %305, %cst_76 [1] : vector<2x32x16xf32> to vector<2x16xf32>
    %cst_77 = arith.constant 0.176776692 : f32
    %307 = vector.broadcast %cst_77 : f32 to vector<2x16xf32>
    %308 = arith.mulf %306, %307 : vector<2x16xf32>
    %cst_78 = arith.constant dense<0xFF800000> : vector<2xf32>
    %309 = vector.multi_reduction <maximumf>, %308, %cst_78 [1] : vector<2x16xf32> to vector<2xf32>
    %310 = vector.shape_cast %309 : vector<2xf32> to vector<2x1xf32>
    %311 = vector.broadcast %310 : vector<2x1xf32> to vector<2x16xf32>
    %312 = arith.subf %308, %311 : vector<2x16xf32>
    %313 = math.exp %312 : vector<2x16xf32>
    %cst_79 = arith.constant dense<0.000000e+00> : vector<2xf32>
    %314 = vector.multi_reduction <add>, %313, %cst_79 [1] : vector<2x16xf32> to vector<2xf32>
    %315 = vector.shape_cast %314 : vector<2xf32> to vector<2x1xf32>
    %316 = tpu.reciprocal %315 : vector<2x1xf32> -> vector<2x1xf32>
    %317 = vector.broadcast %316 : vector<2x1xf32> to vector<2x16xf32>
    %318 = arith.mulf %313, %317 : vector<2x16xf32>
    %319 = vector.shape_cast %318 : vector<2x16xf32> to vector<2x1x16xf32>
    %320 = vector.broadcast %319 : vector<2x1x16xf32> to vector<2x32x16xf32>
    %321 = arith.mulf %0, %320 : vector<2x32x16xf32>
    %cst_80 = arith.constant dense<0.000000e+00> : vector<2x32xf32>
    %322 = vector.multi_reduction <add>, %321, %cst_80 [2] : vector<2x32x16xf32> to vector<2x32xf32>
    %323 = tpu.concatenate %302, %300, %322 in 1 : vector<2x4xf32>, vector<2x32xf32>, vector<2x32xf32> -> vector<2x68xf32>
    %cst_81 = arith.constant dense<0.000000e+00> : vector<2x128xf32>
    %324 = tpu.matmul %323, %1, %cst_81 {dimension_numbers = #tpu.dot_dimension_numbers<[1], [0], [0], [1], [0, 0, 1, 1], [], []>} : vector<2x68xf32>, vector<68x128xf32>, vector<2x128xf32> -> vector<2x128xf32>
    %325 = vector.broadcast %2 : vector<1x128xf32> to vector<2x128xf32>
    %326 = arith.addf %324, %325 : vector<2x128xf32>
    %327 = vector.extract_strided_slice %326 {offsets = [0, 0], sizes = [2, 96], strides = [1, 1]} : vector<2x128xf32> to vector<2x96xf32>
    %328 = arith.negf %327 : vector<2x96xf32>
    %329 = math.exp %328 : vector<2x96xf32>
    %cst_82 = arith.constant 1.000000e+00 : f32
    %330 = vector.broadcast %cst_82 : f32 to vector<2x96xf32>
    %331 = arith.addf %330, %329 : vector<2x96xf32>
    %332 = arith.divf %330, %331 : vector<2x96xf32>
    %333 = vector.extract_strided_slice %326 {offsets = [0, 96], sizes = [2, 32], strides = [1, 1]} : vector<2x128xf32> to vector<2x32xf32>
    %334 = math.tanh %333 : vector<2x32xf32>
    %335 = vector.extract_strided_slice %332 {offsets = [0, 0], sizes = [2, 32], strides = [1, 1]} : vector<2x96xf32> to vector<2x32xf32>
    %336 = vector.extract_strided_slice %332 {offsets = [0, 32], sizes = [2, 32], strides = [1, 1]} : vector<2x96xf32> to vector<2x32xf32>
    %337 = vector.extract_strided_slice %332 {offsets = [0, 64], sizes = [2, 32], strides = [1, 1]} : vector<2x96xf32> to vector<2x32xf32>
    %338 = arith.mulf %336, %298 : vector<2x32xf32>
    %339 = arith.mulf %335, %334 : vector<2x32xf32>
    %340 = arith.addf %338, %339 : vector<2x32xf32>
    %341 = math.tanh %340 : vector<2x32xf32>
    %342 = arith.mulf %337, %341 : vector<2x32xf32>
    %c0_83 = arith.constant 0 : index
    %c224 = arith.constant 224 : index
    %343 = vector.load %arg5[%c0_83, %c224] : memref<2x256xf32, #tpu.memory_space<vmem>>, vector<2x32xf32>
    tpu.vector_store %arg5[%c0_83, %c224], %342 {strides = array<i32>} : memref<2x256xf32, #tpu.memory_space<vmem>>, vector<2x32xf32>,
    %c0_84 = arith.constant 0 : index
    %c0_85 = arith.constant 0 : index
    %344 = vector.load %arg6[%c0_84, %c0_85] : memref<2x32xf32, #tpu.memory_space<vmem>>, vector<2x32xf32>
    tpu.vector_store %arg6[%c0_84, %c0_85], %342 {strides = array<i32>} : memref<2x32xf32, #tpu.memory_space<vmem>>, vector<2x32xf32>,
    %c0_86 = arith.constant 0 : index
    %c0_87 = arith.constant 0 : index
    %345 = vector.load %arg7[%c0_86, %c0_87] : memref<2x32xf32, #tpu.memory_space<vmem>>, vector<2x32xf32>
    tpu.vector_store %arg7[%c0_86, %c0_87], %340 {strides = array<i32>} : memref<2x32xf32, #tpu.memory_space<vmem>>, vector<2x32xf32>,
    return
  }
  func.func @transform_0(%arg0: i32) -> (i32, i32) {
    %c0_i32 = arith.constant 0 : i32
    %c0_i32_0 = arith.constant 0 : i32
    return %c0_i32, %arg0 : i32, i32
  }
  func.func @transform_1(%arg0: i32) -> (i32, i32, i32) {
    %c0_i32 = arith.constant 0 : i32
    %c0_i32_0 = arith.constant 0 : i32
    %c0_i32_1 = arith.constant 0 : i32
    %c0_i32_2 = arith.constant 0 : i32
    return %c0_i32, %c0_i32_0, %c0_i32_1 : i32, i32, i32
  }
  func.func @transform_2(%arg0: i32) -> (i32, i32) {
    %c0_i32 = arith.constant 0 : i32
    %c0_i32_0 = arith.constant 0 : i32
    %c0_i32_1 = arith.constant 0 : i32
    return %c0_i32, %c0_i32_0 : i32, i32
  }
  func.func @transform_3(%arg0: i32) -> (i32, i32) {
    %c0_i32 = arith.constant 0 : i32
    %c0_i32_0 = arith.constant 0 : i32
    %c0_i32_1 = arith.constant 0 : i32
    return %c0_i32, %c0_i32_0 : i32, i32
  }
  func.func @transform_4(%arg0: i32) -> (i32, i32) {
    %c0_i32 = arith.constant 0 : i32
    %c0_i32_0 = arith.constant 0 : i32
    return %c0_i32, %arg0 : i32, i32
  }
}

</mosaic_0001>

<llo_original>
// kernel: tpu_custom_call.1
$region0: #{tpu_custom_call.1}
  #allocation0 [shape = 'u32[]', space=smem, size = 0x4, offset = 0x4, fixed_abs, tag = 'smem constant byte address 0x4 - core index']
  #allocation1 [shape = 'u32[144,128]{1,0:T(1,128)}', space=vmem, size = 0x12000, scoped, tag = 'internal scratch']
  #allocation2 [shape = 'f32[2,32]{1,0:T(2,128)}', space=vmem, size = 0x400, scoped, tag = 'scratch operand']
  #allocation3 [shape = 'f32[2,32]{1,0:T(2,128)}', space=vmem, size = 0x400, scoped, tag = 'scratch operand']
  %s0 = inlined_call_operand.vmem [shape: f32[2,32], index: 0, kind: input, shape index: {}]
  %s1 = inlined_call_operand.vmem [shape: f32[2,32,16], index: 1, kind: input, shape index: {}]
  %s2 = inlined_call_operand.vmem [shape: f32[68,128], index: 2, kind: input, shape index: {}]
  %s3 = inlined_call_operand.vmem [shape: f32[1,128], index: 3, kind: input, shape index: {}]
  %s4 = inlined_call_operand.hbm [shape: f32[2,256], index: 4, kind: output, shape index: {}]
  %s5 = sld [smem:[#allocation0]]
  $region30: #{tpu_custom_call.1} parent=0
    _
  %s7 = ssub.s32 1, %s5
  %s8 = scalar_select 0, %s7, %s5
  $region1: #{tpu_custom_call.1} parent=0
    #allocation4 [shape = 'u8[2048]{0}', space=vmem, size = 0x800, scoped, tag = 'output window, operand 0, single buffered']
    #allocation5 [shape = 's32[1]{0}', space=sflag, size = 0x4, scoped, tag = 'scoped memory for tpu_custom_call.1']
    %9 = vsyncpa [#allocation5], 0
    // Predicated region
    $region2: #{tpu_custom_call.1} parent=1 // pred_check
      _
    $region3: #{tpu_custom_call.1} parent=1 // pred_check_branch
      %11 = sbr.rel (0) target = $region5
    $region4: #{tpu_custom_call.1} parent=1 // pred_region
      _
    $region5: #{tpu_custom_call.1} parent=1 // pred_fallthru
      _
    // Predicated region
    $region6: #{tpu_custom_call.1} parent=1 // pred_check
      _
    $region7: #{tpu_custom_call.1} parent=1 // pred_check_branch
      %13 = sbr.rel (0) target = $region9
    $region8: #{tpu_custom_call.1} parent=1 // pred_region
      _
    $region9: #{tpu_custom_call.1} parent=1 // pred_fallthru
      _
    // Predicated region
    $region10: #{tpu_custom_call.1} parent=1 // pred_check
      _
    $region11: #{tpu_custom_call.1} parent=1 // pred_check_branch
      %15 = sbr.rel (0) target = $region13
    $region12: #{tpu_custom_call.1} parent=1 // pred_region
      _
    $region13: #{tpu_custom_call.1} parent=1 // pred_fallthru
      _
    // Predicated region
    $region14: #{tpu_custom_call.1} parent=1 // pred_check
      _
    $region15: #{tpu_custom_call.1} parent=1 // pred_check_branch
      %17 = sbr.rel (0) target = $region17
    $region16: #{tpu_custom_call.1} parent=1 // pred_region
      _
    $region17: #{tpu_custom_call.1} parent=1 // pred_fallthru
      _
    %v18 = vld [vmem:[%s1] sm:$0xff]
    %v19 = vld [vmem:[%s1 + $0x8] sm:$0xff]
    %v20 = vld [vmem:[%s1 + $0x10] sm:$0xff]
    %v21 = vld [vmem:[%s1 + $0x18] sm:$0xff]
    %v22 = vld [vmem:[%s1 + $0x20] sm:$0xff]
    %v23 = vld [vmem:[%s1 + $0x28] sm:$0xff]
    %v24 = vld [vmem:[%s1 + $0x30] sm:$0xff]
    %v25 = vld [vmem:[%s1 + $0x38] sm:$0xff]
    %v26 = vld [vmem:[%s2] sm:$0xff]
    %v27 = vld [vmem:[%s2 + $0x8] sm:$0xff]
    %v28 = vld [vmem:[%s2 + $0x10] sm:$0xff]
    %v29 = vld [vmem:[%s2 + $0x18] sm:$0xff]
    %v30 = vld [vmem:[%s2 + $0x20] sm:$0xff]
    %v31 = vld [vmem:[%s2 + $0x28] sm:$0xff]
    %v32 = vld [vmem:[%s2 + $0x30] sm:$0xff]
    %v33 = vld [vmem:[%s2 + $0x38] sm:$0xff]
    %v34 = vld [vmem:[%s2 + $0x40] sm:$0xf]
    %v35 = vld [vmem:[%s3] sm:$0x1]
    %p36 = scmp.eq.s32.totalorder 0, 0
    // Predicated region
    $region18: #{tpu_custom_call.1} parent=1 // pred_check
      %p37 = pneg %p36
    $region19: #{tpu_custom_call.1} parent=1 // pred_check_branch
      %39 = sbr.rel (%p37) target = $region21
    $region20: #{tpu_custom_call.1} parent=1 // pred_region
      %vm40 = vcmask 130048
      %v41 = vsel %vm40, %v18, 0.0
      %42 = vadd.xlane.f32.xlu0 %v41
      %v43 = vpop.xlane.xlu0 %42
      %v44 = vsel %vm40, %v19, 0.0
      %45 = vadd.xlane.f32.xlu0 %v44
      %v46 = vpop.xlane.xlu0 %45
      %v47 = vsel %vm40, %v20, 0.0
      %48 = vadd.xlane.f32.xlu0 %v47
      %v49 = vpop.xlane.xlu0 %48
      %v50 = vsel %vm40, %v21, 0.0
      %51 = vadd.xlane.f32.xlu0 %v50
      %v52 = vpop.xlane.xlu0 %51
      %v53 = vsel %vm40, %v22, 0.0
      %54 = vadd.xlane.f32.xlu0 %v53
      %v55 = vpop.xlane.xlu0 %54
      %v56 = vsel %vm40, %v23, 0.0
      %57 = vadd.xlane.f32.xlu0 %v56
      %v58 = vpop.xlane.xlu0 %57
      %v59 = vsel %vm40, %v24, 0.0
      %60 = vadd.xlane.f32.xlu0 %v59
      %v61 = vpop.xlane.xlu0 %60
      %v62 = vsel %vm40, %v25, 0.0
      %63 = vadd.xlane.f32.xlu0 %v62
      %v64 = vpop.xlane.xlu0 %63
      %v65 = vrcp.pop 16.0
      %v66 = vmul.f32 %v43, %v65
      %v67 = vmul.f32 %v46, %v65
      %v68 = vmul.f32 %v49, %v65
      %v69 = vmul.f32 %v52, %v65
      %v70 = vmul.f32 %v55, %v65
      %v71 = vmul.f32 %v58, %v65
      %v72 = vmul.f32 %v61, %v65
      %v73 = vmul.f32 %v64, %v65
      %v82 = vlaneseq
      %v83 = vand.u32 %v82, 127
      %v84 = vlaneseq
      %v85 = vshrl.u32 %v84, 7
      %v86 = vsub.s32 %v83, %v85
      %v87 = vrot.slane %v66, %v86
      %v88 = vadd.s32 %v83, 4294967288
      %v89 = vlaneseq
      %v90 = vshrl.u32 %v89, 7
      %v91 = vsub.s32 %v88, %v90
      %v92 = vrot.slane %v67, %v91
      %vm93 = vcmask 130112
      %v94 = vsel %vm93, %v92, %v87
      %v95 = vadd.s32 %v83, 4294967280
      %v96 = vlaneseq
      %v97 = vshrl.u32 %v96, 7
      %v98 = vsub.s32 %v95, %v97
      %v99 = vrot.slane %v68, %v98
      %vm100 = vcmask 195712
      %v101 = vsel %vm100, %v99, %v94
      %v102 = vadd.s32 %v83, 4294967272
      %v103 = vlaneseq
      %v104 = vshrl.u32 %v103, 7
      %v105 = vsub.s32 %v102, %v104
      %v106 = vrot.slane %v69, %v105
      %vm107 = vcmask 261312
      %v108 = vsel %vm107, %v106, %v101
      %v109 = vlaneseq
      %v110 = vshrl.u32 %v109, 7
      %v111 = vsub.s32 %v83, %v110
      %v112 = vrot.slane %v70, %v111
      %v113 = vlaneseq
      %v114 = vshrl.u32 %v113, 7
      %v115 = vsub.s32 %v88, %v114
      %v116 = vrot.slane %v71, %v115
      %v117 = vsel %vm93, %v116, %v112
      %v118 = vlaneseq
      %v119 = vshrl.u32 %v118, 7
      %v120 = vsub.s32 %v95, %v119
      %v121 = vrot.slane %v72, %v120
      %v122 = vsel %vm100, %v121, %v117
      %v123 = vlaneseq
      %v124 = vshrl.u32 %v123, 7
      %v125 = vsub.s32 %v102, %v124
      %v126 = vrot.slane %v73, %v125
      %v127 = vsel %vm107, %v126, %v122
      %vm128 = vcmask 1041409
      %v129 = vsel %vm128, %v127, %v108
      %vm131 = vcmask 254976
      %132 = vst.msk [vmem:[#allocation2] sm:$0x3] %vm131, %v129
      %133 = vst.msk [vmem:[#allocation3] sm:$0x3] %vm131, %v129
    $region21: #{tpu_custom_call.1} parent=1 // pred_fallthru
      _
    %v134 = vld [vmem:[#allocation2] sm:$0x3]
    %v135 = vld [vmem:[#allocation3] sm:$0x3]
    %v136 = vld [vmem:[%s0] sm:$0x3]
    %v137 = vlaneseq
    %v138 = vshrl.u32 %v137, 7
    %v139 = vsub.s32 0, %v138
    %v140 = vrot.slane %v134, %v139
    %142 = vbcast.lane.b32.xlu0 %v140, 256
    %v143 = vpop.permute.xlu0 %142
    %s145 = sor.u32 256, 8
    %146 = vbcast.lane.b32.xlu0 %v140, %s145
    %v147 = vpop.permute.xlu0 %146
    %s149 = sor.u32 256, 16
    %150 = vbcast.lane.b32.xlu0 %v140, %s149
    %v151 = vpop.permute.xlu0 %150
    %s153 = sor.u32 256, 24
    %154 = vbcast.lane.b32.xlu0 %v140, %s153
    %v155 = vpop.permute.xlu0 %154
    %v156 = vlaneseq
    %v157 = vshrl.u32 %v156, 7
    %v158 = vsub.s32 1, %v157
    %v159 = vrot.slane %v134, %v158
    %161 = vbcast.lane.b32.xlu0 %v159, 256
    %v162 = vpop.permute.xlu0 %161
    %s164 = sor.u32 256, 8
    %165 = vbcast.lane.b32.xlu0 %v159, %s164
    %v166 = vpop.permute.xlu0 %165
    %s168 = sor.u32 256, 16
    %169 = vbcast.lane.b32.xlu0 %v159, %s168
    %v170 = vpop.permute.xlu0 %169
    %s172 = sor.u32 256, 24
    %173 = vbcast.lane.b32.xlu0 %v159, %s172
    %v174 = vpop.permute.xlu0 %173
    %v175 = vmul.f32 %v143, %v18
    %v176 = vmul.f32 %v147, %v19
    %v177 = vmul.f32 %v151, %v20
    %v178 = vmul.f32 %v155, %v21
    %v179 = vmul.f32 %v162, %v22
    %v180 = vmul.f32 %v166, %v23
    %v181 = vmul.f32 %v170, %v24
    %v182 = vmul.f32 %v174, %v25
    %vm183 = vcmask 130048
    %v184 = vsel %vm183, %v175, 0.0
    %v185 = vsel %vm183, %v176, 0.0
    %v186 = vadd.f32 %v184, %v185
    %v187 = vsel %vm183, %v177, 0.0
    %v188 = vadd.f32 %v186, %v187
    %v189 = vsel %vm183, %v178, 0.0
    %v190 = vadd.f32 %v188, %v189
    %v191 = vrot.slane %v190, 4
    %v192 = vadd.f32 %v190, %v191
    %v193 = vrot.slane %v192, 2
    %v194 = vadd.f32 %v192, %v193
    %v195 = vrot.slane %v194, 1
    %v196 = vadd.f32 %v194, %v195
    %v197 = vsel %vm183, %v179, 0.0
    %v198 = vsel %vm183, %v180, 0.0
    %v199 = vadd.f32 %v197, %v198
    %v200 = vsel %vm183, %v181, 0.0
    %v201 = vadd.f32 %v199, %v200
    %v202 = vsel %vm183, %v182, 0.0
    %v203 = vadd.f32 %v201, %v202
    %v204 = vrot.slane %v203, 4
    %v205 = vadd.f32 %v203, %v204
    %v206 = vrot.slane %v205, 2
    %v207 = vadd.f32 %v205, %v206
    %v208 = vrot.slane %v207, 1
    %v209 = vadd.f32 %v207, %v208
    %v210 = vmul.f32 %v196, 0.17677669
    %v211 = vmul.f32 %v209, 0.17677669
    %vm214 = vcmask 1041409
    %v215 = vsel %vm214, %v211, %v210
    %vm217 = vcmask 123904
    %v218 = vsel %vm217, %v215, -inf
    %219 = vmax.xlane.f32.xlu0 %v218
    %v220 = vpop.xlane.xlu0 %219
    %v222 = vrot.slane %v220, 1
    %v225 = vsub.f32 %v210, %v220
    %v226 = vsub.f32 %v211, %v222
    %v227 = vmul.f32 %v225, 1.442695
    %v228 = vpow.pop %v227
    %v229 = vmul.f32 %v226, 1.442695
    %v230 = vpow.pop %v229
    %v233 = vrot.slane %v230, 7
    %v234 = vsel %vm214, %v233, %v228
    %v236 = vsel %vm217, %v234, 0.0
    %237 = vadd.xlane.f32.xlu0 %v236
    %v238 = vpop.xlane.xlu0 %237
    %v239 = vrcp.pop %v238
    %v241 = vrot.slane %v239, 1
    %v244 = vmul.f32 %v228, %v239
    %v245 = vmul.f32 %v230, %v241
    %v246 = vlaneseq
    %v247 = vshrl.u32 %v246, 7
    %v248 = vsub.s32 0, %v247
    %v249 = vrot.slane %v244, %v248
    %v250 = vlaneseq
    %v251 = vshrl.u32 %v250, 7
    %v252 = vsub.s32 0, %v251
    %v253 = vrot.slane %v245, %v252
    %v254 = vmul.f32 %v18, %v249
    %v255 = vmul.f32 %v19, %v249
    %v256 = vmul.f32 %v20, %v249
    %v257 = vmul.f32 %v21, %v249
    %v258 = vmul.f32 %v22, %v253
    %v259 = vmul.f32 %v23, %v253
    %v260 = vmul.f32 %v24, %v253
    %v261 = vmul.f32 %v25, %v253
    %v262 = vsel %vm183, %v254, 0.0
    %263 = vadd.xlane.f32.xlu0 %v262
    %v264 = vpop.xlane.xlu0 %263
    %v265 = vsel %vm183, %v255, 0.0
    %266 = vadd.xlane.f32.xlu0 %v265
    %v267 = vpop.xlane.xlu0 %266
    %v268 = vsel %vm183, %v256, 0.0
    %269 = vadd.xlane.f32.xlu0 %v268
    %v270 = vpop.xlane.xlu0 %269
    %v271 = vsel %vm183, %v257, 0.0
    %272 = vadd.xlane.f32.xlu0 %v271
    %v273 = vpop.xlane.xlu0 %272
    %v274 = vsel %vm183, %v258, 0.0
    %275 = vadd.xlane.f32.xlu0 %v274
    %v276 = vpop.xlane.xlu0 %275
    %v277 = vsel %vm183, %v259, 0.0
    %278 = vadd.xlane.f32.xlu0 %v277
    %v279 = vpop.xlane.xlu0 %278
    %v280 = vsel %vm183, %v260, 0.0
    %281 = vadd.xlane.f32.xlu0 %v280
    %v282 = vpop.xlane.xlu0 %281
    %v283 = vsel %vm183, %v261, 0.0
    %284 = vadd.xlane.f32.xlu0 %v283
    %v285 = vpop.xlane.xlu0 %284
    %287 = vrot.lane.b32.xlu0 %v134, 4
    %v288 = vpop.permute.xlu0 %287
    %v298 = vlaneseq
    %v299 = vand.u32 %v298, 127
    %v300 = vadd.s32 %v299, 4294967260
    %v301 = vlaneseq
    %v302 = vshrl.u32 %v301, 7
    %v303 = vsub.s32 %v300, %v302
    %v304 = vrot.slane %v264, %v303
    %v305 = vadd.s32 %v299, 4294967252
    %v306 = vlaneseq
    %v307 = vshrl.u32 %v306, 7
    %v308 = vsub.s32 %v305, %v307
    %v309 = vrot.slane %v267, %v308
    %vm310 = vcmask 425312
    %v311 = vsel %vm310, %v309, %v304
    %v312 = vadd.s32 %v299, 4294967244
    %v313 = vlaneseq
    %v314 = vshrl.u32 %v313, 7
    %v315 = vsub.s32 %v312, %v314
    %v316 = vrot.slane %v270, %v315
    %vm317 = vcmask 490912
    %v318 = vsel %vm317, %v316, %v311
    %v319 = vadd.s32 %v299, 4294967236
    %v320 = vlaneseq
    %v321 = vshrl.u32 %v320, 7
    %v322 = vsub.s32 %v319, %v321
    %v323 = vrot.slane %v273, %v322
    %vm324 = vcmask 556512
    %v325 = vsel %vm324, %v323, %v318
    %v326 = vlaneseq
    %v327 = vshrl.u32 %v326, 7
    %v328 = vsub.s32 %v300, %v327
    %v329 = vrot.slane %v276, %v328
    %v330 = vlaneseq
    %v331 = vshrl.u32 %v330, 7
    %v332 = vsub.s32 %v305, %v331
    %v333 = vrot.slane %v279, %v332
    %v334 = vsel %vm310, %v333, %v329
    %v335 = vlaneseq
    %v336 = vshrl.u32 %v335, 7
    %v337 = vsub.s32 %v312, %v336
    %v338 = vrot.slane %v282, %v337
    %v339 = vsel %vm317, %v338, %v334
    %v340 = vlaneseq
    %v341 = vshrl.u32 %v340, 7
    %v342 = vsub.s32 %v319, %v341
    %v343 = vrot.slane %v285, %v342
    %v344 = vsel %vm324, %v343, %v339
    %v345 = vsel %vm214, %v344, %v325
    %vm347 = vcmask 31744
    %v348 = vsel %vm347, %v136, %v288
    %vm349 = vcmask 293888
    %v350 = vsel %vm349, %v348, %v345
    %v352 = vlaneseq
    %v353 = vshrl.u32 %v352, 7
    %v354 = vsub.s32 0, %v353
    %v355 = vrot.slane %v35, %v354
    %vm357 = vcmask 556032
    %v359 = vsel %vm357, %v350, 0
    %vm361 = vcmask 1043456
    %v363 = vsel %vm361, %v34, 0
    %365 = vmatprep.subr.mxu0 0.0
    %366 = vmatpush1.msra.mxu0 0.0
    %367 = vmatprep.subr.mxu0 0.0
    %368 = vmatpush1.msra.mxu0 0.0
    %369 = vmatprep.subr.mxu0 0.0
    %370 = vmatpush1.msra.mxu0 0.0
    %371 = vmatprep.subr.mxu0 0.0
    %372 = vmatpush1.msra.mxu0 0.0
    %373 = vmatprep.subr.mxu0 0.0
    %374 = vmatpush1.msra.mxu0 0.0
    %375 = vmatprep.subr.mxu0 0.0
    %376 = vmatpush1.msra.mxu0 0.0
    %377 = vmatprep.subr.mxu0 0.0
    %378 = vmatpush1.msra.mxu0 0.0
    %379 = vmatprep.subr.mxu0 0.0
    %380 = vmatpush1.msra.mxu0 %v363
    %381 = vmatprep.subr.mxu0 0.0
    %382 = vmatpush1.msra.mxu0 %v33
    %383 = vmatprep.subr.mxu0 0.0
    %384 = vmatpush1.msra.mxu0 %v32
    %385 = vmatprep.subr.mxu0 0.0
    %386 = vmatpush1.msra.mxu0 %v31
    %387 = vmatprep.subr.mxu0 0.0
    %388 = vmatpush1.msra.mxu0 %v30
    %389 = vmatprep.subr.mxu0 0.0
    %390 = vmatpush1.msra.mxu0 %v29
    %391 = vmatprep.subr.mxu0 0.0
    %392 = vmatpush1.msra.mxu0 %v28
    %393 = vmatprep.subr.mxu0 0.0
    %394 = vmatpush1.msra.mxu0 %v27
    %395 = vmatprep.subr.mxu0 0.0
    %396 = vmatpush1.msra.mxu0 %v26
    %397 = vmatprep.subr.mxu0 0.0
    %398 = vmatpush2.msra.mxu0 0.0
    %399 = vmatprep.subr.mxu0 0.0
    %400 = vmatpush2.msra.mxu0 0.0
    %401 = vmatprep.subr.mxu0 0.0
    %402 = vmatpush2.msra.mxu0 0.0
    %403 = vmatprep.subr.mxu0 0.0
    %404 = vmatpush2.msra.mxu0 0.0
    %405 = vmatprep.subr.mxu0 0.0
    %406 = vmatpush2.msra.mxu0 0.0
    %407 = vmatprep.subr.mxu0 0.0
    %408 = vmatpush2.msra.mxu0 0.0
    %409 = vmatprep.subr.mxu0 0.0
    %410 = vmatpush2.msra.mxu0 0.0
    %411 = vmatprep.subr.mxu0 0.0
    %412 = vmatpush2.msra.mxu0 0.0
    %413 = vmatprep.subr.mxu0 0.0
    %414 = vmatpush2.msra.mxu0 0.0
    %415 = vmatprep.subr.mxu0 0.0
    %416 = vmatpush2.msra.mxu0 0.0
    %417 = vmatprep.subr.mxu0 0.0
    %418 = vmatpush2.msra.mxu0 0.0
    %419 = vmatprep.subr.mxu0 0.0
    %420 = vmatpush2.msra.mxu0 0.0
    %421 = vmatprep.subr.mxu0 0.0
    %422 = vmatpush2.msra.mxu0 0.0
    %423 = vmatprep.subr.mxu0 0.0
    %424 = vmatpush2.msra.mxu0 0.0
    %425 = vmatprep.subr.mxu0 0.0
    %426 = vmatpush2.msra.mxu0 0.0
    %427 = vmatprep.subr.mxu0 0.0
    %428 = vmatpush2.msra.mxu0 0.0
    %429 = vmatprep.mubr.f32.mxu0 0.0
    %430 = vmatmul.mubr.f32.gmra.mxu0 %v359
    %v431 = vpop.f32.mrf.mxu0
    %v432 = vadd.f32 %v355, %v431
    %v433 = vpop.f32.mrf.mxu0
    %434 = vdwg.mxu0
    %v435 = vxor.u32 %v432, 2147483648
    %v436 = vmul.f32 %v435, 1.442695
    %v437 = vpow.pop %v436
    %v438 = vadd.f32 %v437, 1.0
    %v439 = vrcp.pop %v438
    %v440 = vmul.f32 1.0, %v439
    %v441 = vtanh.pop %v432
    %443 = vrot.lane.b32.xlu0 %v135, 32
    %v444 = vpop.permute.xlu0 %443
    %v446 = vmul.f32 %v440, %v444
    %448 = vrot.lane.b32.xlu0 %v441, 32
    %v449 = vpop.permute.xlu0 %448
    %v451 = vmul.f32 %v440, %v449
    %453 = vrot.lane.b32.xlu0 %v451, 32
    %v454 = vpop.permute.xlu0 %453
    %v456 = vadd.f32 %v446, %v454
    %v457 = vtanh.pop %v456
    %459 = vrot.lane.b32.xlu0 %v457, 32
    %v460 = vpop.permute.xlu0 %459
    %v462 = vmul.f32 %v440, %v460
    %v465 = vunpack.c.l.s4 1983009808
    %v466 = vunpack.c.0.s8 %v465
    %v467 = vlaneseq
    %v468 = vshrl.u32 %v467, 7
    %v469 = vsub.s32 %v466, %v468
    %v470 = vrot.slane %v462, %v469
    %471 = vrot.lane.b32.xlu0 %v470, 64
    %v472 = vpop.permute.xlu0 %471
    %vm474 = vcmask 254976
    %475 = vst.msk [vmem:[#allocation4] sm:$0x3] %vm474, %v472
    %v476 = vld [vmem:[%s0] sm:$0x3]
    %v477 = vlaneseq
    %v478 = vshrl.u32 %v477, 7
    %v479 = vsub.s32 0, %v478
    %v480 = vrot.slane %v462, %v479
    %s482 = sor.u32 256, 64
    %483 = vbcast.lane.b32.xlu0 %v480, %s482
    %v484 = vpop.permute.xlu0 %483
    %s486 = sor.u32 256, 72
    %487 = vbcast.lane.b32.xlu0 %v480, %s486
    %v488 = vpop.permute.xlu0 %487
    %s490 = sor.u32 256, 80
    %491 = vbcast.lane.b32.xlu0 %v480, %s490
    %v492 = vpop.permute.xlu0 %491
    %s494 = sor.u32 256, 88
    %495 = vbcast.lane.b32.xlu0 %v480, %s494
    %v496 = vpop.permute.xlu0 %495
    %v497 = vlaneseq
    %v498 = vshrl.u32 %v497, 7
    %v499 = vsub.s32 1, %v498
    %v500 = vrot.slane %v462, %v499
    %s502 = sor.u32 256, 64
    %503 = vbcast.lane.b32.xlu0 %v500, %s502
    %v504 = vpop.permute.xlu0 %503
    %s506 = sor.u32 256, 72
    %507 = vbcast.lane.b32.xlu0 %v500, %s506
    %v508 = vpop.permute.xlu0 %507
    %s510 = sor.u32 256, 80
    %511 = vbcast.lane.b32.xlu0 %v500, %s510
    %v512 = vpop.permute.xlu0 %511
    %s514 = sor.u32 256, 88
    %515 = vbcast.lane.b32.xlu0 %v500, %s514
    %v516 = vpop.permute.xlu0 %515
    %v517 = vmul.f32 %v484, %v18
    %v518 = vmul.f32 %v488, %v19
    %v519 = vmul.f32 %v492, %v20
    %v520 = vmul.f32 %v496, %v21
    %v521 = vmul.f32 %v504, %v22
    %v522 = vmul.f32 %v508, %v23
    %v523 = vmul.f32 %v512, %v24
    %v524 = vmul.f32 %v516, %v25
    %v525 = vsel %vm183, %v517, 0.0
    %v526 = vsel %vm183, %v518, 0.0
    %v527 = vadd.f32 %v525, %v526
    %v528 = vsel %vm183, %v519, 0.0
    %v529 = vadd.f32 %v527, %v528
    %v530 = vsel %vm183, %v520, 0.0
    %v531 = vadd.f32 %v529, %v530
    %v532 = vrot.slane %v531, 4
    %v533 = vadd.f32 %v531, %v532
    %v534 = vrot.slane %v533, 2
    %v535 = vadd.f32 %v533, %v534
    %v536 = vrot.slane %v535, 1
    %v537 = vadd.f32 %v535, %v536
    %v538 = vsel %vm183, %v521, 0.0
    %v539 = vsel %vm183, %v522, 0.0
    %v540 = vadd.f32 %v538, %v539
    %v541 = vsel %vm183, %v523, 0.0
    %v542 = vadd.f32 %v540, %v541
    %v543 = vsel %vm183, %v524, 0.0
    %v544 = vadd.f32 %v542, %v543
    %v545 = vrot.slane %v544, 4
    %v546 = vadd.f32 %v544, %v545
    %v547 = vrot.slane %v546, 2
    %v548 = vadd.f32 %v546, %v547
    %v549 = vrot.slane %v548, 1
    %v550 = vadd.f32 %v548, %v549
    %v551 = vmul.f32 %v537, 0.17677669
    %v552 = vmul.f32 %v550, 0.17677669
    %v555 = vsel %vm214, %v552, %v551
    %v557 = vsel %vm217, %v555, -inf
    %558 = vmax.xlane.f32.xlu0 %v557
    %v559 = vpop.xlane.xlu0 %558
    %v561 = vrot.slane %v559, 1
    %v564 = vsub.f32 %v551, %v559
    %v565 = vsub.f32 %v552, %v561
    %v566 = vmul.f32 %v564, 1.442695
    %v567 = vpow.pop %v566
    %v568 = vmul.f32 %v565, 1.442695
    %v569 = vpow.pop %v568
    %v572 = vrot.slane %v569, 7
    %v573 = vsel %vm214, %v572, %v567
    %v575 = vsel %vm217, %v573, 0.0
    %576 = vadd.xlane.f32.xlu0 %v575
    %v577 = vpop.xlane.xlu0 %576
    %v578 = vrcp.pop %v577
    %v580 = vrot.slane %v578, 1
    %v583 = vmul.f32 %v567, %v578
    %v584 = vmul.f32 %v569, %v580
    %v585 = vlaneseq
    %v586 = vshrl.u32 %v585, 7
    %v587 = vsub.s32 0, %v586
    %v588 = vrot.slane %v583, %v587
    %v589 = vlaneseq
    %v590 = vshrl.u32 %v589, 7
    %v591 = vsub.s32 0, %v590
    %v592 = vrot.slane %v584, %v591
    %v593 = vmul.f32 %v18, %v588
    %v594 = vmul.f32 %v19, %v588
    %v595 = vmul.f32 %v20, %v588
    %v596 = vmul.f32 %v21, %v588
    %v597 = vmul.f32 %v22, %v592
    %v598 = vmul.f32 %v23, %v592
    %v599 = vmul.f32 %v24, %v592
    %v600 = vmul.f32 %v25, %v592
    %v601 = vsel %vm183, %v593, 0.0
    %602 = vadd.xlane.f32.xlu0 %v601
    %v603 = vpop.xlane.xlu0 %602
    %v604 = vsel %vm183, %v594, 0.0
    %605 = vadd.xlane.f32.xlu0 %v604
    %v606 = vpop.xlane.xlu0 %605
    %v607 = vsel %vm183, %v595, 0.0
    %608 = vadd.xlane.f32.xlu0 %v607
    %v609 = vpop.xlane.xlu0 %608
    %v610 = vsel %vm183, %v596, 0.0
    %611 = vadd.xlane.f32.xlu0 %v610
    %v612 = vpop.xlane.xlu0 %611
    %v613 = vsel %vm183, %v597, 0.0
    %614 = vadd.xlane.f32.xlu0 %v613
    %v615 = vpop.xlane.xlu0 %614
    %v616 = vsel %vm183, %v598, 0.0
    %617 = vadd.xlane.f32.xlu0 %v616
    %v618 = vpop.xlane.xlu0 %617
    %v619 = vsel %vm183, %v599, 0.0
    %620 = vadd.xlane.f32.xlu0 %v619
    %v621 = vpop.xlane.xlu0 %620
    %v622 = vsel %vm183, %v600, 0.0
    %623 = vadd.xlane.f32.xlu0 %v622
    %v624 = vpop.xlane.xlu0 %623
    %626 = vrot.lane.b32.xlu0 %v476, 124
    %v627 = vpop.permute.xlu0 %626
    %629 = vrot.lane.b32.xlu0 %v462, 68
    %v630 = vpop.permute.xlu0 %629
    %v640 = vlaneseq
    %v641 = vshrl.u32 %v640, 7
    %v642 = vsub.s32 %v300, %v641
    %v643 = vrot.slane %v603, %v642
    %v644 = vlaneseq
    %v645 = vshrl.u32 %v644, 7
    %v646 = vsub.s32 %v305, %v645
    %v647 = vrot.slane %v606, %v646
    %v648 = vsel %vm310, %v647, %v643
    %v649 = vlaneseq
    %v650 = vshrl.u32 %v649, 7
    %v651 = vsub.s32 %v312, %v650
    %v652 = vrot.slane %v609, %v651
    %v653 = vsel %vm317, %v652, %v648
    %v654 = vlaneseq
    %v655 = vshrl.u32 %v654, 7
    %v656 = vsub.s32 %v319, %v655
    %v657 = vrot.slane %v612, %v656
    %v658 = vsel %vm324, %v657, %v653
    %v659 = vlaneseq
    %v660 = vshrl.u32 %v659, 7
    %v661 = vsub.s32 %v300, %v660
    %v662 = vrot.slane %v615, %v661
    %v663 = vlaneseq
    %v664 = vshrl.u32 %v663, 7
    %v665 = vsub.s32 %v305, %v664
    %v666 = vrot.slane %v618, %v665
    %v667 = vsel %vm310, %v666, %v662
    %v668 = vlaneseq
    %v669 = vshrl.u32 %v668, 7
    %v670 = vsub.s32 %v312, %v669
    %v671 = vrot.slane %v621, %v670
    %v672 = vsel %vm317, %v671, %v667
    %v673 = vlaneseq
    %v674 = vshrl.u32 %v673, 7
    %v675 = vsub.s32 %v319, %v674
    %v676 = vrot.slane %v624, %v675
    %v677 = vsel %vm324, %v676, %v672
    %v678 = vsel %vm214, %v677, %v658
    %v680 = vsel %vm347, %v627, %v630
    %v681 = vsel %vm349, %v680, %v678
    %v683 = vsel %vm357, %v681, 0
    %685 = vmatprep.subr.mxu0 0.0
    %686 = vmatpush1.msra.mxu0 0.0
    %687 = vmatprep.subr.mxu0 0.0
    %688 = vmatpush1.msra.mxu0 0.0
    %689 = vmatprep.subr.mxu0 0.0
    %690 = vmatpush1.msra.mxu0 0.0
    %691 = vmatprep.subr.mxu0 0.0
    %692 = vmatpush1.msra.mxu0 0.0
    %693 = vmatprep.subr.mxu0 0.0
    %694 = vmatpush1.msra.mxu0 0.0
    %695 = vmatprep.subr.mxu0 0.0
    %696 = vmatpush1.msra.mxu0 0.0
    %697 = vmatprep.subr.mxu0 0.0
    %698 = vmatpush1.msra.mxu0 0.0
    %699 = vmatprep.subr.mxu0 0.0
    %700 = vmatpush1.msra.mxu0 %v363
    %701 = vmatprep.subr.mxu0 0.0
    %702 = vmatpush1.msra.mxu0 %v33
    %703 = vmatprep.subr.mxu0 0.0
    %704 = vmatpush1.msra.mxu0 %v32
    %705 = vmatprep.subr.mxu0 0.0
    %706 = vmatpush1.msra.mxu0 %v31
    %707 = vmatprep.subr.mxu0 0.0
    %708 = vmatpush1.msra.mxu0 %v30
    %709 = vmatprep.subr.mxu0 0.0
    %710 = vmatpush1.msra.mxu0 %v29
    %711 = vmatprep.subr.mxu0 0.0
    %712 = vmatpush1.msra.mxu0 %v28
    %713 = vmatprep.subr.mxu0 0.0
    %714 = vmatpush1.msra.mxu0 %v27
    %715 = vmatprep.subr.mxu0 0.0
    %716 = vmatpush1.msra.mxu0 %v26
    %717 = vmatprep.subr.mxu0 0.0
    %718 = vmatpush2.msra.mxu0 0.0
    %719 = vmatprep.subr.mxu0 0.0
    %720 = vmatpush2.msra.mxu0 0.0
    %721 = vmatprep.subr.mxu0 0.0
    %722 = vmatpush2.msra.mxu0 0.0
    %723 = vmatprep.subr.mxu0 0.0
    %724 = vmatpush2.msra.mxu0 0.0
    %725 = vmatprep.subr.mxu0 0.0
    %726 = vmatpush2.msra.mxu0 0.0
    %727 = vmatprep.subr.mxu0 0.0
    %728 = vmatpush2.msra.mxu0 0.0
    %729 = vmatprep.subr.mxu0 0.0
    %730 = vmatpush2.msra.mxu0 0.0
    %731 = vmatprep.subr.mxu0 0.0
    %732 = vmatpush2.msra.mxu0 0.0
    %733 = vmatprep.subr.mxu0 0.0
    %734 = vmatpush2.msra.mxu0 0.0
    %735 = vmatprep.subr.mxu0 0.0
    %736 = vmatpush2.msra.mxu0 0.0
    %737 = vmatprep.subr.mxu0 0.0
    %738 = vmatpush2.msra.mxu0 0.0
    %739 = vmatprep.subr.mxu0 0.0
    %740 = vmatpush2.msra.mxu0 0.0
    %741 = vmatprep.subr.mxu0 0.0
    %742 = vmatpush2.msra.mxu0 0.0
    %743 = vmatprep.subr.mxu0 0.0
    %744 = vmatpush2.msra.mxu0 0.0
    %745 = vmatprep.subr.mxu0 0.0
    %746 = vmatpush2.msra.mxu0 0.0
    %747 = vmatprep.subr.mxu0 0.0
    %748 = vmatpush2.msra.mxu0 0.0
    %749 = vmatprep.mubr.f32.mxu0 0.0
    %750 = vmatmul.mubr.f32.gmra.mxu0 %v683
    %v751 = vpop.f32.mrf.mxu0
    %v752 = vadd.f32 %v355, %v751
    %v753 = vpop.f32.mrf.mxu0
    %754 = vdwg.mxu0
    %v755 = vxor.u32 %v752, 2147483648
    %v756 = vmul.f32 %v755, 1.442695
    %v757 = vpow.pop %v756
    %v758 = vadd.f32 %v757, 1.0
    %v759 = vrcp.pop %v758
    %v760 = vmul.f32 1.0, %v759
    %v761 = vtanh.pop %v752
    %v762 = vmul.f32 %v760, %v456
    %764 = vrot.lane.b32.xlu0 %v761, 32
    %v765 = vpop.permute.xlu0 %764
    %v767 = vmul.f32 %v760, %v765
    %769 = vrot.lane.b32.xlu0 %v767, 32
    %v770 = vpop.permute.xlu0 %769
    %v772 = vadd.f32 %v762, %v770
    %v773 = vtanh.pop %v772
    %775 = vrot.lane.b32.xlu0 %v773, 32
    %v776 = vpop.permute.xlu0 %775
    %v778 = vmul.f32 %v760, %v776
    %v781 = vunpack.c.l.s4 1983009808
    %v782 = vunpack.c.0.s8 %v781
    %v783 = vlaneseq
    %v784 = vshrl.u32 %v783, 7
    %v785 = vsub.s32 %v782, %v784
    %v786 = vrot.slane %v778, %v785
    %787 = vrot.lane.b32.xlu0 %v786, 96
    %v788 = vpop.permute.xlu0 %787
    %vm790 = vcmask 517376
    %791 = vst.msk [vmem:[#allocation4] sm:$0x3] %vm790, %v788
    %v792 = vld [vmem:[%s0] sm:$0x3]
    %v793 = vlaneseq
    %v794 = vshrl.u32 %v793, 7
    %v795 = vsub.s32 0, %v794
    %v796 = vrot.slane %v778, %v795
    %s798 = sor.u32 256, 64
    %799 = vbcast.lane.b32.xlu0 %v796, %s798
    %v800 = vpop.permute.xlu0 %799
    %s802 = sor.u32 256, 72
    %803 = vbcast.lane.b32.xlu0 %v796, %s802
    %v804 = vpop.permute.xlu0 %803
    %s806 = sor.u32 256, 80
    %807 = vbcast.lane.b32.xlu0 %v796, %s806
    %v808 = vpop.permute.xlu0 %807
    %s810 = sor.u32 256, 88
    %811 = vbcast.lane.b32.xlu0 %v796, %s810
    %v812 = vpop.permute.xlu0 %811
    %v813 = vlaneseq
    %v814 = vshrl.u32 %v813, 7
    %v815 = vsub.s32 1, %v814
    %v816 = vrot.slane %v778, %v815
    %s818 = sor.u32 256, 64
    %819 = vbcast.lane.b32.xlu0 %v816, %s818
    %v820 = vpop.permute.xlu0 %819
    %s822 = sor.u32 256, 72
    %823 = vbcast.lane.b32.xlu0 %v816, %s822
    %v824 = vpop.permute.xlu0 %823
    %s826 = sor.u32 256, 80
    %827 = vbcast.lane.b32.xlu0 %v816, %s826
    %v828 = vpop.permute.xlu0 %827
    %s830 = sor.u32 256, 88
    %831 = vbcast.lane.b32.xlu0 %v816, %s830
    %v832 = vpop.permute.xlu0 %831
    %v833 = vmul.f32 %v800, %v18
    %v834 = vmul.f32 %v804, %v19
    %v835 = vmul.f32 %v808, %v20
    %v836 = vmul.f32 %v812, %v21
    %v837 = vmul.f32 %v820, %v22
    %v838 = vmul.f32 %v824, %v23
    %v839 = vmul.f32 %v828, %v24
    %v840 = vmul.f32 %v832, %v25
    %v841 = vsel %vm183, %v833, 0.0
    %v842 = vsel %vm183, %v834, 0.0
    %v843 = vadd.f32 %v841, %v842
    %v844 = vsel %vm183, %v835, 0.0
    %v845 = vadd.f32 %v843, %v844
    %v846 = vsel %vm183, %v836, 0.0
    %v847 = vadd.f32 %v845, %v846
    %v848 = vrot.slane %v847, 4
    %v849 = vadd.f32 %v847, %v848
    %v850 = vrot.slane %v849, 2
    %v851 = vadd.f32 %v849, %v850
    %v852 = vrot.slane %v851, 1
    %v853 = vadd.f32 %v851, %v852
    %v854 = vsel %vm183, %v837, 0.0
    %v855 = vsel %vm183, %v838, 0.0
    %v856 = vadd.f32 %v854, %v855
    %v857 = vsel %vm183, %v839, 0.0
    %v858 = vadd.f32 %v856, %v857
    %v859 = vsel %vm183, %v840, 0.0
    %v860 = vadd.f32 %v858, %v859
    %v861 = vrot.slane %v860, 4
    %v862 = vadd.f32 %v860, %v861
    %v863 = vrot.slane %v862, 2
    %v864 = vadd.f32 %v862, %v863
    %v865 = vrot.slane %v864, 1
    %v866 = vadd.f32 %v864, %v865
    %v867 = vmul.f32 %v853, 0.17677669
    %v868 = vmul.f32 %v866, 0.17677669
    %v871 = vsel %vm214, %v868, %v867
    %v873 = vsel %vm217, %v871, -inf
    %874 = vmax.xlane.f32.xlu0 %v873
    %v875 = vpop.xlane.xlu0 %874
    %v877 = vrot.slane %v875, 1
    %v880 = vsub.f32 %v867, %v875
    %v881 = vsub.f32 %v868, %v877
    %v882 = vmul.f32 %v880, 1.442695
    %v883 = vpow.pop %v882
    %v884 = vmul.f32 %v881, 1.442695
    %v885 = vpow.pop %v884
    %v888 = vrot.slane %v885, 7
    %v889 = vsel %vm214, %v888, %v883
    %v891 = vsel %vm217, %v889, 0.0
    %892 = vadd.xlane.f32.xlu0 %v891
    %v893 = vpop.xlane.xlu0 %892
    %v894 = vrcp.pop %v893
    %v896 = vrot.slane %v894, 1
    %v899 = vmul.f32 %v883, %v894
    %v900 = vmul.f32 %v885, %v896
    %v901 = vlaneseq
    %v902 = vshrl.u32 %v901, 7
    %v903 = vsub.s32 0, %v902
    %v904 = vrot.slane %v899, %v903
    %v905 = vlaneseq
    %v906 = vshrl.u32 %v905, 7
    %v907 = vsub.s32 0, %v906
    %v908 = vrot.slane %v900, %v907
    %v909 = vmul.f32 %v18, %v904
    %v910 = vmul.f32 %v19, %v904
    %v911 = vmul.f32 %v20, %v904
    %v912 = vmul.f32 %v21, %v904
    %v913 = vmul.f32 %v22, %v908
    %v914 = vmul.f32 %v23, %v908
    %v915 = vmul.f32 %v24, %v908
    %v916 = vmul.f32 %v25, %v908
    %v917 = vsel %vm183, %v909, 0.0
    %918 = vadd.xlane.f32.xlu0 %v917
    %v919 = vpop.xlane.xlu0 %918
    %v920 = vsel %vm183, %v910, 0.0
    %921 = vadd.xlane.f32.xlu0 %v920
    %v922 = vpop.xlane.xlu0 %921
    %v923 = vsel %vm183, %v911, 0.0
    %924 = vadd.xlane.f32.xlu0 %v923
    %v925 = vpop.xlane.xlu0 %924
    %v926 = vsel %vm183, %v912, 0.0
    %927 = vadd.xlane.f32.xlu0 %v926
    %v928 = vpop.xlane.xlu0 %927
    %v929 = vsel %vm183, %v913, 0.0
    %930 = vadd.xlane.f32.xlu0 %v929
    %v931 = vpop.xlane.xlu0 %930
    %v932 = vsel %vm183, %v914, 0.0
    %933 = vadd.xlane.f32.xlu0 %v932
    %v934 = vpop.xlane.xlu0 %933
    %v935 = vsel %vm183, %v915, 0.0
    %936 = vadd.xlane.f32.xlu0 %v935
    %v937 = vpop.xlane.xlu0 %936
    %v938 = vsel %vm183, %v916, 0.0
    %939 = vadd.xlane.f32.xlu0 %v938
    %v940 = vpop.xlane.xlu0 %939
    %942 = vrot.lane.b32.xlu0 %v792, 120
    %v943 = vpop.permute.xlu0 %942
    %945 = vrot.lane.b32.xlu0 %v778, 68
    %v946 = vpop.permute.xlu0 %945
    %v956 = vlaneseq
    %v957 = vshrl.u32 %v956, 7
    %v958 = vsub.s32 %v300, %v957
    %v959 = vrot.slane %v919, %v958
    %v960 = vlaneseq
    %v961 = vshrl.u32 %v960, 7
    %v962 = vsub.s32 %v305, %v961
    %v963 = vrot.slane %v922, %v962
    %v964 = vsel %vm310, %v963, %v959
    %v965 = vlaneseq
    %v966 = vshrl.u32 %v965, 7
    %v967 = vsub.s32 %v312, %v966
    %v968 = vrot.slane %v925, %v967
    %v969 = vsel %vm317, %v968, %v964
    %v970 = vlaneseq
    %v971 = vshrl.u32 %v970, 7
    %v972 = vsub.s32 %v319, %v971
    %v973 = vrot.slane %v928, %v972
    %v974 = vsel %vm324, %v973, %v969
    %v975 = vlaneseq
    %v976 = vshrl.u32 %v975, 7
    %v977 = vsub.s32 %v300, %v976
    %v978 = vrot.slane %v931, %v977
    %v979 = vlaneseq
    %v980 = vshrl.u32 %v979, 7
    %v981 = vsub.s32 %v305, %v980
    %v982 = vrot.slane %v934, %v981
    %v983 = vsel %vm310, %v982, %v978
    %v984 = vlaneseq
    %v985 = vshrl.u32 %v984, 7
    %v986 = vsub.s32 %v312, %v985
    %v987 = vrot.slane %v937, %v986
    %v988 = vsel %vm317, %v987, %v983
    %v989 = vlaneseq
    %v990 = vshrl.u32 %v989, 7
    %v991 = vsub.s32 %v319, %v990
    %v992 = vrot.slane %v940, %v991
    %v993 = vsel %vm324, %v992, %v988
    %v994 = vsel %vm214, %v993, %v974
    %v996 = vsel %vm347, %v943, %v946
    %v997 = vsel %vm349, %v996, %v994
    %v999 = vsel %vm357, %v997, 0
    %1001 = vmatprep.subr.mxu0 0.0
    %1002 = vmatpush1.msra.mxu0 0.0
    %1003 = vmatprep.subr.mxu0 0.0
    %1004 = vmatpush1.msra.mxu0 0.0
    %1005 = vmatprep.subr.mxu0 0.0
    %1006 = vmatpush1.msra.mxu0 0.0
    %1007 = vmatprep.subr.mxu0 0.0
    %1008 = vmatpush1.msra.mxu0 0.0
    %1009 = vmatprep.subr.mxu0 0.0
    %1010 = vmatpush1.msra.mxu0 0.0
    %1011 = vmatprep.subr.mxu0 0.0
    %1012 = vmatpush1.msra.mxu0 0.0
    %1013 = vmatprep.subr.mxu0 0.0
    %1014 = vmatpush1.msra.mxu0 0.0
    %1015 = vmatprep.subr.mxu0 0.0
    %1016 = vmatpush1.msra.mxu0 %v363
    %1017 = vmatprep.subr.mxu0 0.0
    %1018 = vmatpush1.msra.mxu0 %v33
    %1019 = vmatprep.subr.mxu0 0.0
    %1020 = vmatpush1.msra.mxu0 %v32
    %1021 = vmatprep.subr.mxu0 0.0
    %1022 = vmatpush1.msra.mxu0 %v31
    %1023 = vmatprep.subr.mxu0 0.0
    %1024 = vmatpush1.msra.mxu0 %v30
    %1025 = vmatprep.subr.mxu0 0.0
    %1026 = vmatpush1.msra.mxu0 %v29
    %1027 = vmatprep.subr.mxu0 0.0
    %1028 = vmatpush1.msra.mxu0 %v28
    %1029 = vmatprep.subr.mxu0 0.0
    %1030 = vmatpush1.msra.mxu0 %v27
    %1031 = vmatprep.subr.mxu0 0.0
    %1032 = vmatpush1.msra.mxu0 %v26
    %1033 = vmatprep.subr.mxu0 0.0
    %1034 = vmatpush2.msra.mxu0 0.0
    %1035 = vmatprep.subr.mxu0 0.0
    %1036 = vmatpush2.msra.mxu0 0.0
    %1037 = vmatprep.subr.mxu0 0.0
    %1038 = vmatpush2.msra.mxu0 0.0
    %1039 = vmatprep.subr.mxu0 0.0
    %1040 = vmatpush2.msra.mxu0 0.0
    %1041 = vmatprep.subr.mxu0 0.0
    %1042 = vmatpush2.msra.mxu0 0.0
    %1043 = vmatprep.subr.mxu0 0.0
    %1044 = vmatpush2.msra.mxu0 0.0
    %1045 = vmatprep.subr.mxu0 0.0
    %1046 = vmatpush2.msra.mxu0 0.0
    %1047 = vmatprep.subr.mxu0 0.0
    %1048 = vmatpush2.msra.mxu0 0.0
    %1049 = vmatprep.subr.mxu0 0.0
    %1050 = vmatpush2.msra.mxu0 0.0
    %1051 = vmatprep.subr.mxu0 0.0
    %1052 = vmatpush2.msra.mxu0 0.0
    %1053 = vmatprep.subr.mxu0 0.0
    %1054 = vmatpush2.msra.mxu0 0.0
    %1055 = vmatprep.subr.mxu0 0.0
    %1056 = vmatpush2.msra.mxu0 0.0
    %1057 = vmatprep.subr.mxu0 0.0
    %1058 = vmatpush2.msra.mxu0 0.0
    %1059 = vmatprep.subr.mxu0 0.0
    %1060 = vmatpush2.msra.mxu0 0.0
    %1061 = vmatprep.subr.mxu0 0.0
    %1062 = vmatpush2.msra.mxu0 0.0
    %1063 = vmatprep.subr.mxu0 0.0
    %1064 = vmatpush2.msra.mxu0 0.0
    %1065 = vmatprep.mubr.f32.mxu0 0.0
    %1066 = vmatmul.mubr.f32.gmra.mxu0 %v999
    %v1067 = vpop.f32.mrf.mxu0
    %v1068 = vadd.f32 %v355, %v1067
    %v1069 = vpop.f32.mrf.mxu0
    %1070 = vdwg.mxu0
    %v1071 = vxor.u32 %v1068, 2147483648
    %v1072 = vmul.f32 %v1071, 1.442695
    %v1073 = vpow.pop %v1072
    %v1074 = vadd.f32 %v1073, 1.0
    %v1075 = vrcp.pop %v1074
    %v1076 = vmul.f32 1.0, %v1075
    %v1077 = vtanh.pop %v1068
    %v1078 = vmul.f32 %v1076, %v772
    %1080 = vrot.lane.b32.xlu0 %v1077, 32
    %v1081 = vpop.permute.xlu0 %1080
    %v1083 = vmul.f32 %v1076, %v1081
    %1085 = vrot.lane.b32.xlu0 %v1083, 32
    %v1086 = vpop.permute.xlu0 %1085
    %v1088 = vadd.f32 %v1078, %v1086
    %v1089 = vtanh.pop %v1088
    %1091 = vrot.lane.b32.xlu0 %v1089, 32
    %v1092 = vpop.permute.xlu0 %1091
    %v1094 = vmul.f32 %v1076, %v1092
    %vm1095 = vcmask 779776
    %1096 = vst.msk [vmem:[#allocation4] sm:$0x3] %vm1095, %v1094
    %v1097 = vld [vmem:[%s0] sm:$0x3]
    %v1098 = vlaneseq
    %v1099 = vshrl.u32 %v1098, 7
    %v1100 = vsub.s32 0, %v1099
    %v1101 = vrot.slane %v1094, %v1100
    %s1103 = sor.u32 256, 64
    %1104 = vbcast.lane.b32.xlu0 %v1101, %s1103
    %v1105 = vpop.permute.xlu0 %1104
    %s1107 = sor.u32 256, 72
    %1108 = vbcast.lane.b32.xlu0 %v1101, %s1107
    %v1109 = vpop.permute.xlu0 %1108
    %s1111 = sor.u32 256, 80
    %1112 = vbcast.lane.b32.xlu0 %v1101, %s1111
    %v1113 = vpop.permute.xlu0 %1112
    %s1115 = sor.u32 256, 88
    %1116 = vbcast.lane.b32.xlu0 %v1101, %s1115
    %v1117 = vpop.permute.xlu0 %1116
    %v1118 = vlaneseq
    %v1119 = vshrl.u32 %v1118, 7
    %v1120 = vsub.s32 1, %v1119
    %v1121 = vrot.slane %v1094, %v1120
    %s1123 = sor.u32 256, 64
    %1124 = vbcast.lane.b32.xlu0 %v1121, %s1123
    %v1125 = vpop.permute.xlu0 %1124
    %s1127 = sor.u32 256, 72
    %1128 = vbcast.lane.b32.xlu0 %v1121, %s1127
    %v1129 = vpop.permute.xlu0 %1128
    %s1131 = sor.u32 256, 80
    %1132 = vbcast.lane.b32.xlu0 %v1121, %s1131
    %v1133 = vpop.permute.xlu0 %1132
    %s1135 = sor.u32 256, 88
    %1136 = vbcast.lane.b32.xlu0 %v1121, %s1135
    %v1137 = vpop.permute.xlu0 %1136
    %v1138 = vmul.f32 %v1105, %v18
    %v1139 = vmul.f32 %v1109, %v19
    %v1140 = vmul.f32 %v1113, %v20
    %v1141 = vmul.f32 %v1117, %v21
    %v1142 = vmul.f32 %v1125, %v22
    %v1143 = vmul.f32 %v1129, %v23
    %v1144 = vmul.f32 %v1133, %v24
    %v1145 = vmul.f32 %v1137, %v25
    %v1146 = vsel %vm183, %v1138, 0.0
    %v1147 = vsel %vm183, %v1139, 0.0
    %v1148 = vadd.f32 %v1146, %v1147
    %v1149 = vsel %vm183, %v1140, 0.0
    %v1150 = vadd.f32 %v1148, %v1149
    %v1151 = vsel %vm183, %v1141, 0.0
    %v1152 = vadd.f32 %v1150, %v1151
    %v1153 = vrot.slane %v1152, 4
    %v1154 = vadd.f32 %v1152, %v1153
    %v1155 = vrot.slane %v1154, 2
    %v1156 = vadd.f32 %v1154, %v1155
    %v1157 = vrot.slane %v1156, 1
    %v1158 = vadd.f32 %v1156, %v1157
    %v1159 = vsel %vm183, %v1142, 0.0
    %v1160 = vsel %vm183, %v1143, 0.0
    %v1161 = vadd.f32 %v1159, %v1160
    %v1162 = vsel %vm183, %v1144, 0.0
    %v1163 = vadd.f32 %v1161, %v1162
    %v1164 = vsel %vm183, %v1145, 0.0
    %v1165 = vadd.f32 %v1163, %v1164
    %v1166 = vrot.slane %v1165, 4
    %v1167 = vadd.f32 %v1165, %v1166
    %v1168 = vrot.slane %v1167, 2
    %v1169 = vadd.f32 %v1167, %v1168
    %v1170 = vrot.slane %v1169, 1
    %v1171 = vadd.f32 %v1169, %v1170
    %v1172 = vmul.f32 %v1158, 0.17677669
    %v1173 = vmul.f32 %v1171, 0.17677669
    %v1176 = vsel %vm214, %v1173, %v1172
    %v1178 = vsel %vm217, %v1176, -inf
    %1179 = vmax.xlane.f32.xlu0 %v1178
    %v1180 = vpop.xlane.xlu0 %1179
    %v1182 = vrot.slane %v1180, 1
    %v1185 = vsub.f32 %v1172, %v1180
    %v1186 = vsub.f32 %v1173, %v1182
    %v1187 = vmul.f32 %v1185, 1.442695
    %v1188 = vpow.pop %v1187
    %v1189 = vmul.f32 %v1186, 1.442695
    %v1190 = vpow.pop %v1189
    %v1193 = vrot.slane %v1190, 7
    %v1194 = vsel %vm214, %v1193, %v1188
    %v1196 = vsel %vm217, %v1194, 0.0
    %1197 = vadd.xlane.f32.xlu0 %v1196
    %v1198 = vpop.xlane.xlu0 %1197
    %v1199 = vrcp.pop %v1198
    %v1201 = vrot.slane %v1199, 1
    %v1204 = vmul.f32 %v1188, %v1199
    %v1205 = vmul.f32 %v1190, %v1201
    %v1206 = vlaneseq
    %v1207 = vshrl.u32 %v1206, 7
    %v1208 = vsub.s32 0, %v1207
    %v1209 = vrot.slane %v1204, %v1208
    %v1210 = vlaneseq
    %v1211 = vshrl.u32 %v1210, 7
    %v1212 = vsub.s32 0, %v1211
    %v1213 = vrot.slane %v1205, %v1212
    %v1214 = vmul.f32 %v18, %v1209
    %v1215 = vmul.f32 %v19, %v1209
    %v1216 = vmul.f32 %v20, %v1209
    %v1217 = vmul.f32 %v21, %v1209
    %v1218 = vmul.f32 %v22, %v1213
    %v1219 = vmul.f32 %v23, %v1213
    %v1220 = vmul.f32 %v24, %v1213
    %v1221 = vmul.f32 %v25, %v1213
    %v1222 = vsel %vm183, %v1214, 0.0
    %1223 = vadd.xlane.f32.xlu0 %v1222
    %v1224 = vpop.xlane.xlu0 %1223
    %v1225 = vsel %vm183, %v1215, 0.0
    %1226 = vadd.xlane.f32.xlu0 %v1225
    %v1227 = vpop.xlane.xlu0 %1226
    %v1228 = vsel %vm183, %v1216, 0.0
    %1229 = vadd.xlane.f32.xlu0 %v1228
    %v1230 = vpop.xlane.xlu0 %1229
    %v1231 = vsel %vm183, %v1217, 0.0
    %1232 = vadd.xlane.f32.xlu0 %v1231
    %v1233 = vpop.xlane.xlu0 %1232
    %v1234 = vsel %vm183, %v1218, 0.0
    %1235 = vadd.xlane.f32.xlu0 %v1234
    %v1236 = vpop.xlane.xlu0 %1235
    %v1237 = vsel %vm183, %v1219, 0.0
    %1238 = vadd.xlane.f32.xlu0 %v1237
    %v1239 = vpop.xlane.xlu0 %1238
    %v1240 = vsel %vm183, %v1220, 0.0
    %1241 = vadd.xlane.f32.xlu0 %v1240
    %v1242 = vpop.xlane.xlu0 %1241
    %v1243 = vsel %vm183, %v1221, 0.0
    %1244 = vadd.xlane.f32.xlu0 %v1243
    %v1245 = vpop.xlane.xlu0 %1244
    %1247 = vrot.lane.b32.xlu0 %v1097, 116
    %v1248 = vpop.permute.xlu0 %1247
    %1251 = vrot.lane.b32.xlu0 %v1094, 68
    %v1252 = vpop.permute.xlu0 %1251
    %v1262 = vlaneseq
    %v1263 = vshrl.u32 %v1262, 7
    %v1264 = vsub.s32 %v300, %v1263
    %v1265 = vrot.slane %v1224, %v1264
    %v1266 = vlaneseq
    %v1267 = vshrl.u32 %v1266, 7
    %v1268 = vsub.s32 %v305, %v1267
    %v1269 = vrot.slane %v1227, %v1268
    %v1270 = vsel %vm310, %v1269, %v1265
    %v1271 = vlaneseq
    %v1272 = vshrl.u32 %v1271, 7
    %v1273 = vsub.s32 %v312, %v1272
    %v1274 = vrot.slane %v1230, %v1273
    %v1275 = vsel %vm317, %v1274, %v1270
    %v1276 = vlaneseq
    %v1277 = vshrl.u32 %v1276, 7
    %v1278 = vsub.s32 %v319, %v1277
    %v1279 = vrot.slane %v1233, %v1278
    %v1280 = vsel %vm324, %v1279, %v1275
    %v1281 = vlaneseq
    %v1282 = vshrl.u32 %v1281, 7
    %v1283 = vsub.s32 %v300, %v1282
    %v1284 = vrot.slane %v1236, %v1283
    %v1285 = vlaneseq
    %v1286 = vshrl.u32 %v1285, 7
    %v1287 = vsub.s32 %v305, %v1286
    %v1288 = vrot.slane %v1239, %v1287
    %v1289 = vsel %vm310, %v1288, %v1284
    %v1290 = vlaneseq
    %v1291 = vshrl.u32 %v1290, 7
    %v1292 = vsub.s32 %v312, %v1291
    %v1293 = vrot.slane %v1242, %v1292
    %v1294 = vsel %vm317, %v1293, %v1289
    %v1295 = vlaneseq
    %v1296 = vshrl.u32 %v1295, 7
    %v1297 = vsub.s32 %v319, %v1296
    %v1298 = vrot.slane %v1245, %v1297
    %v1299 = vsel %vm324, %v1298, %v1294
    %v1300 = vsel %vm214, %v1299, %v1280
    %v1302 = vsel %vm347, %v1248, %v1252
    %v1303 = vsel %vm349, %v1302, %v1300
    %v1305 = vsel %vm357, %v1303, 0
    %1307 = vmatprep.subr.mxu0 0.0
    %1308 = vmatpush1.msra.mxu0 0.0
    %1309 = vmatprep.subr.mxu0 0.0
    %1310 = vmatpush1.msra.mxu0 0.0
    %1311 = vmatprep.subr.mxu0 0.0
    %1312 = vmatpush1.msra.mxu0 0.0
    %1313 = vmatprep.subr.mxu0 0.0
    %1314 = vmatpush1.msra.mxu0 0.0
    %1315 = vmatprep.subr.mxu0 0.0
    %1316 = vmatpush1.msra.mxu0 0.0
    %1317 = vmatprep.subr.mxu0 0.0
    %1318 = vmatpush1.msra.mxu0 0.0
    %1319 = vmatprep.subr.mxu0 0.0
    %1320 = vmatpush1.msra.mxu0 0.0
    %1321 = vmatprep.subr.mxu0 0.0
    %1322 = vmatpush1.msra.mxu0 %v363
    %1323 = vmatprep.subr.mxu0 0.0
    %1324 = vmatpush1.msra.mxu0 %v33
    %1325 = vmatprep.subr.mxu0 0.0
    %1326 = vmatpush1.msra.mxu0 %v32
    %1327 = vmatprep.subr.mxu0 0.0
    %1328 = vmatpush1.msra.mxu0 %v31
    %1329 = vmatprep.subr.mxu0 0.0
    %1330 = vmatpush1.msra.mxu0 %v30
    %1331 = vmatprep.subr.mxu0 0.0
    %1332 = vmatpush1.msra.mxu0 %v29
    %1333 = vmatprep.subr.mxu0 0.0
    %1334 = vmatpush1.msra.mxu0 %v28
    %1335 = vmatprep.subr.mxu0 0.0
    %1336 = vmatpush1.msra.mxu0 %v27
    %1337 = vmatprep.subr.mxu0 0.0
    %1338 = vmatpush1.msra.mxu0 %v26
    %1339 = vmatprep.subr.mxu0 0.0
    %1340 = vmatpush2.msra.mxu0 0.0
    %1341 = vmatprep.subr.mxu0 0.0
    %1342 = vmatpush2.msra.mxu0 0.0
    %1343 = vmatprep.subr.mxu0 0.0
    %1344 = vmatpush2.msra.mxu0 0.0
    %1345 = vmatprep.subr.mxu0 0.0
    %1346 = vmatpush2.msra.mxu0 0.0
    %1347 = vmatprep.subr.mxu0 0.0
    %1348 = vmatpush2.msra.mxu0 0.0
    %1349 = vmatprep.subr.mxu0 0.0
    %1350 = vmatpush2.msra.mxu0 0.0
    %1351 = vmatprep.subr.mxu0 0.0
    %1352 = vmatpush2.msra.mxu0 0.0
    %1353 = vmatprep.subr.mxu0 0.0
    %1354 = vmatpush2.msra.mxu0 0.0
    %1355 = vmatprep.subr.mxu0 0.0
    %1356 = vmatpush2.msra.mxu0 0.0
    %1357 = vmatprep.subr.mxu0 0.0
    %1358 = vmatpush2.msra.mxu0 0.0
    %1359 = vmatprep.subr.mxu0 0.0
    %1360 = vmatpush2.msra.mxu0 0.0
    %1361 = vmatprep.subr.mxu0 0.0
    %1362 = vmatpush2.msra.mxu0 0.0
    %1363 = vmatprep.subr.mxu0 0.0
    %1364 = vmatpush2.msra.mxu0 0.0
    %1365 = vmatprep.subr.mxu0 0.0
    %1366 = vmatpush2.msra.mxu0 0.0
    %1367 = vmatprep.subr.mxu0 0.0
    %1368 = vmatpush2.msra.mxu0 0.0
    %1369 = vmatprep.subr.mxu0 0.0
    %1370 = vmatpush2.msra.mxu0 0.0
    %1371 = vmatprep.mubr.f32.mxu0 0.0
    %1372 = vmatmul.mubr.f32.gmra.mxu0 %v1305
    %v1373 = vpop.f32.mrf.mxu0
    %v1374 = vadd.f32 %v355, %v1373
    %v1375 = vpop.f32.mrf.mxu0
    %1376 = vdwg.mxu0
    %v1377 = vxor.u32 %v1374, 2147483648
    %v1378 = vmul.f32 %v1377, 1.442695
    %v1379 = vpow.pop %v1378
    %v1380 = vadd.f32 %v1379, 1.0
    %v1381 = vrcp.pop %v1380
    %v1382 = vmul.f32 1.0, %v1381
    %v1383 = vtanh.pop %v1374
    %v1384 = vmul.f32 %v1382, %v1088
    %1386 = vrot.lane.b32.xlu0 %v1383, 32
    %v1387 = vpop.permute.xlu0 %1386
    %v1389 = vmul.f32 %v1382, %v1387
    %1391 = vrot.lane.b32.xlu0 %v1389, 32
    %v1392 = vpop.permute.xlu0 %1391
    %v1394 = vadd.f32 %v1384, %v1392
    %v1395 = vtanh.pop %v1394
    %1397 = vrot.lane.b32.xlu0 %v1395, 32
    %v1398 = vpop.permute.xlu0 %1397
    %v1400 = vmul.f32 %v1382, %v1398
    %v1403 = vunpack.c.l.s4 1983009808
    %v1404 = vunpack.c.0.s8 %v1403
    %v1405 = vlaneseq
    %v1406 = vshrl.u32 %v1405, 7
    %v1407 = vsub.s32 %v1404, %v1406
    %v1408 = vrot.slane %v1400, %v1407
    %1409 = vrot.lane.b32.xlu0 %v1408, 32
    %v1410 = vpop.permute.xlu0 %1409
    %vm1412 = vcmask 1042176
    %1413 = vst.msk [vmem:[#allocation4] sm:$0x3] %vm1412, %v1410
    %v1414 = vld [vmem:[%s0] sm:$0x3]
    %v1415 = vlaneseq
    %v1416 = vshrl.u32 %v1415, 7
    %v1417 = vsub.s32 0, %v1416
    %v1418 = vrot.slane %v1400, %v1417
    %s1420 = sor.u32 256, 64
    %1421 = vbcast.lane.b32.xlu0 %v1418, %s1420
    %v1422 = vpop.permute.xlu0 %1421
    %s1424 = sor.u32 256, 72
    %1425 = vbcast.lane.b32.xlu0 %v1418, %s1424
    %v1426 = vpop.permute.xlu0 %1425
    %s1428 = sor.u32 256, 80
    %1429 = vbcast.lane.b32.xlu0 %v1418, %s1428
    %v1430 = vpop.permute.xlu0 %1429
    %s1432 = sor.u32 256, 88
    %1433 = vbcast.lane.b32.xlu0 %v1418, %s1432
    %v1434 = vpop.permute.xlu0 %1433
    %v1435 = vlaneseq
    %v1436 = vshrl.u32 %v1435, 7
    %v1437 = vsub.s32 1, %v1436
    %v1438 = vrot.slane %v1400, %v1437
    %s1440 = sor.u32 256, 64
    %1441 = vbcast.lane.b32.xlu0 %v1438, %s1440
    %v1442 = vpop.permute.xlu0 %1441
    %s1444 = sor.u32 256, 72
    %1445 = vbcast.lane.b32.xlu0 %v1438, %s1444
    %v1446 = vpop.permute.xlu0 %1445
    %s1448 = sor.u32 256, 80
    %1449 = vbcast.lane.b32.xlu0 %v1438, %s1448
    %v1450 = vpop.permute.xlu0 %1449
    %s1452 = sor.u32 256, 88
    %1453 = vbcast.lane.b32.xlu0 %v1438, %s1452
    %v1454 = vpop.permute.xlu0 %1453
    %v1455 = vmul.f32 %v1422, %v18
    %v1456 = vmul.f32 %v1426, %v19
    %v1457 = vmul.f32 %v1430, %v20
    %v1458 = vmul.f32 %v1434, %v21
    %v1459 = vmul.f32 %v1442, %v22
    %v1460 = vmul.f32 %v1446, %v23
    %v1461 = vmul.f32 %v1450, %v24
    %v1462 = vmul.f32 %v1454, %v25
    %v1463 = vsel %vm183, %v1455, 0.0
    %v1464 = vsel %vm183, %v1456, 0.0
    %v1465 = vadd.f32 %v1463, %v1464
    %v1466 = vsel %vm183, %v1457, 0.0
    %v1467 = vadd.f32 %v1465, %v1466
    %v1468 = vsel %vm183, %v1458, 0.0
    %v1469 = vadd.f32 %v1467, %v1468
    %v1470 = vrot.slane %v1469, 4
    %v1471 = vadd.f32 %v1469, %v1470
    %v1472 = vrot.slane %v1471, 2
    %v1473 = vadd.f32 %v1471, %v1472
    %v1474 = vrot.slane %v1473, 1
    %v1475 = vadd.f32 %v1473, %v1474
    %v1476 = vsel %vm183, %v1459, 0.0
    %v1477 = vsel %vm183, %v1460, 0.0
    %v1478 = vadd.f32 %v1476, %v1477
    %v1479 = vsel %vm183, %v1461, 0.0
    %v1480 = vadd.f32 %v1478, %v1479
    %v1481 = vsel %vm183, %v1462, 0.0
    %v1482 = vadd.f32 %v1480, %v1481
    %v1483 = vrot.slane %v1482, 4
    %v1484 = vadd.f32 %v1482, %v1483
    %v1485 = vrot.slane %v1484, 2
    %v1486 = vadd.f32 %v1484, %v1485
    %v1487 = vrot.slane %v1486, 1
    %v1488 = vadd.f32 %v1486, %v1487
    %v1489 = vmul.f32 %v1475, 0.17677669
    %v1490 = vmul.f32 %v1488, 0.17677669
    %v1493 = vsel %vm214, %v1490, %v1489
    %v1495 = vsel %vm217, %v1493, -inf
    %1496 = vmax.xlane.f32.xlu0 %v1495
    %v1497 = vpop.xlane.xlu0 %1496
    %v1499 = vrot.slane %v1497, 1
    %v1502 = vsub.f32 %v1489, %v1497
    %v1503 = vsub.f32 %v1490, %v1499
    %v1504 = vmul.f32 %v1502, 1.442695
    %v1505 = vpow.pop %v1504
    %v1506 = vmul.f32 %v1503, 1.442695
    %v1507 = vpow.pop %v1506
    %v1510 = vrot.slane %v1507, 7
    %v1511 = vsel %vm214, %v1510, %v1505
    %v1513 = vsel %vm217, %v1511, 0.0
    %1514 = vadd.xlane.f32.xlu0 %v1513
    %v1515 = vpop.xlane.xlu0 %1514
    %v1516 = vrcp.pop %v1515
    %v1518 = vrot.slane %v1516, 1
    %v1521 = vmul.f32 %v1505, %v1516
    %v1522 = vmul.f32 %v1507, %v1518
    %v1523 = vlaneseq
    %v1524 = vshrl.u32 %v1523, 7
    %v1525 = vsub.s32 0, %v1524
    %v1526 = vrot.slane %v1521, %v1525
    %v1527 = vlaneseq
    %v1528 = vshrl.u32 %v1527, 7
    %v1529 = vsub.s32 0, %v1528
    %v1530 = vrot.slane %v1522, %v1529
    %v1531 = vmul.f32 %v18, %v1526
    %v1532 = vmul.f32 %v19, %v1526
    %v1533 = vmul.f32 %v20, %v1526
    %v1534 = vmul.f32 %v21, %v1526
    %v1535 = vmul.f32 %v22, %v1530
    %v1536 = vmul.f32 %v23, %v1530
    %v1537 = vmul.f32 %v24, %v1530
    %v1538 = vmul.f32 %v25, %v1530
    %v1539 = vsel %vm183, %v1531, 0.0
    %1540 = vadd.xlane.f32.xlu0 %v1539
    %v1541 = vpop.xlane.xlu0 %1540
    %v1542 = vsel %vm183, %v1532, 0.0
    %1543 = vadd.xlane.f32.xlu0 %v1542
    %v1544 = vpop.xlane.xlu0 %1543
    %v1545 = vsel %vm183, %v1533, 0.0
    %1546 = vadd.xlane.f32.xlu0 %v1545
    %v1547 = vpop.xlane.xlu0 %1546
    %v1548 = vsel %vm183, %v1534, 0.0
    %1549 = vadd.xlane.f32.xlu0 %v1548
    %v1550 = vpop.xlane.xlu0 %1549
    %v1551 = vsel %vm183, %v1535, 0.0
    %1552 = vadd.xlane.f32.xlu0 %v1551
    %v1553 = vpop.xlane.xlu0 %1552
    %v1554 = vsel %vm183, %v1536, 0.0
    %1555 = vadd.xlane.f32.xlu0 %v1554
    %v1556 = vpop.xlane.xlu0 %1555
    %v1557 = vsel %vm183, %v1537, 0.0
    %1558 = vadd.xlane.f32.xlu0 %v1557
    %v1559 = vpop.xlane.xlu0 %1558
    %v1560 = vsel %vm183, %v1538, 0.0
    %1561 = vadd.xlane.f32.xlu0 %v1560
    %v1562 = vpop.xlane.xlu0 %1561
    %1564 = vrot.lane.b32.xlu0 %v1414, 112
    %v1565 = vpop.permute.xlu0 %1564
    %1567 = vrot.lane.b32.xlu0 %v1400, 68
    %v1568 = vpop.permute.xlu0 %1567
    %v1578 = vlaneseq
    %v1579 = vshrl.u32 %v1578, 7
    %v1580 = vsub.s32 %v300, %v1579
    %v1581 = vrot.slane %v1541, %v1580
    %v1582 = vlaneseq
    %v1583 = vshrl.u32 %v1582, 7
    %v1584 = vsub.s32 %v305, %v1583
    %v1585 = vrot.slane %v1544, %v1584
    %v1586 = vsel %vm310, %v1585, %v1581
    %v1587 = vlaneseq
    %v1588 = vshrl.u32 %v1587, 7
    %v1589 = vsub.s32 %v312, %v1588
    %v1590 = vrot.slane %v1547, %v1589
    %v1591 = vsel %vm317, %v1590, %v1586
    %v1592 = vlaneseq
    %v1593 = vshrl.u32 %v1592, 7
    %v1594 = vsub.s32 %v319, %v1593
    %v1595 = vrot.slane %v1550, %v1594
    %v1596 = vsel %vm324, %v1595, %v1591
    %v1597 = vlaneseq
    %v1598 = vshrl.u32 %v1597, 7
    %v1599 = vsub.s32 %v300, %v1598
    %v1600 = vrot.slane %v1553, %v1599
    %v1601 = vlaneseq
    %v1602 = vshrl.u32 %v1601, 7
    %v1603 = vsub.s32 %v305, %v1602
    %v1604 = vrot.slane %v1556, %v1603
    %v1605 = vsel %vm310, %v1604, %v1600
    %v1606 = vlaneseq
    %v1607 = vshrl.u32 %v1606, 7
    %v1608 = vsub.s32 %v312, %v1607
    %v1609 = vrot.slane %v1559, %v1608
    %v1610 = vsel %vm317, %v1609, %v1605
    %v1611 = vlaneseq
    %v1612 = vshrl.u32 %v1611, 7
    %v1613 = vsub.s32 %v319, %v1612
    %v1614 = vrot.slane %v1562, %v1613
    %v1615 = vsel %vm324, %v1614, %v1610
    %v1616 = vsel %vm214, %v1615, %v1596
    %v1618 = vsel %vm347, %v1565, %v1568
    %v1619 = vsel %vm349, %v1618, %v1616
    %v1621 = vsel %vm357, %v1619, 0
    %1623 = vmatprep.subr.mxu0 0.0
    %1624 = vmatpush1.msra.mxu0 0.0
    %1625 = vmatprep.subr.mxu0 0.0
    %1626 = vmatpush1.msra.mxu0 0.0
    %1627 = vmatprep.subr.mxu0 0.0
    %1628 = vmatpush1.msra.mxu0 0.0
    %1629 = vmatprep.subr.mxu0 0.0
    %1630 = vmatpush1.msra.mxu0 0.0
    %1631 = vmatprep.subr.mxu0 0.0
    %1632 = vmatpush1.msra.mxu0 0.0
    %1633 = vmatprep.subr.mxu0 0.0
    %1634 = vmatpush1.msra.mxu0 0.0
    %1635 = vmatprep.subr.mxu0 0.0
    %1636 = vmatpush1.msra.mxu0 0.0
    %1637 = vmatprep.subr.mxu0 0.0
    %1638 = vmatpush1.msra.mxu0 %v363
    %1639 = vmatprep.subr.mxu0 0.0
    %1640 = vmatpush1.msra.mxu0 %v33
    %1641 = vmatprep.subr.mxu0 0.0
    %1642 = vmatpush1.msra.mxu0 %v32
    %1643 = vmatprep.subr.mxu0 0.0
    %1644 = vmatpush1.msra.mxu0 %v31
    %1645 = vmatprep.subr.mxu0 0.0
    %1646 = vmatpush1.msra.mxu0 %v30
    %1647 = vmatprep.subr.mxu0 0.0
    %1648 = vmatpush1.msra.mxu0 %v29
    %1649 = vmatprep.subr.mxu0 0.0
    %1650 = vmatpush1.msra.mxu0 %v28
    %1651 = vmatprep.subr.mxu0 0.0
    %1652 = vmatpush1.msra.mxu0 %v27
    %1653 = vmatprep.subr.mxu0 0.0
    %1654 = vmatpush1.msra.mxu0 %v26
    %1655 = vmatprep.subr.mxu0 0.0
    %1656 = vmatpush2.msra.mxu0 0.0
    %1657 = vmatprep.subr.mxu0 0.0
    %1658 = vmatpush2.msra.mxu0 0.0
    %1659 = vmatprep.subr.mxu0 0.0
    %1660 = vmatpush2.msra.mxu0 0.0
    %1661 = vmatprep.subr.mxu0 0.0
    %1662 = vmatpush2.msra.mxu0 0.0
    %1663 = vmatprep.subr.mxu0 0.0
    %1664 = vmatpush2.msra.mxu0 0.0
    %1665 = vmatprep.subr.mxu0 0.0
    %1666 = vmatpush2.msra.mxu0 0.0
    %1667 = vmatprep.subr.mxu0 0.0
    %1668 = vmatpush2.msra.mxu0 0.0
    %1669 = vmatprep.subr.mxu0 0.0
    %1670 = vmatpush2.msra.mxu0 0.0
    %1671 = vmatprep.subr.mxu0 0.0
    %1672 = vmatpush2.msra.mxu0 0.0
    %1673 = vmatprep.subr.mxu0 0.0
    %1674 = vmatpush2.msra.mxu0 0.0
    %1675 = vmatprep.subr.mxu0 0.0
    %1676 = vmatpush2.msra.mxu0 0.0
    %1677 = vmatprep.subr.mxu0 0.0
    %1678 = vmatpush2.msra.mxu0 0.0
    %1679 = vmatprep.subr.mxu0 0.0
    %1680 = vmatpush2.msra.mxu0 0.0
    %1681 = vmatprep.subr.mxu0 0.0
    %1682 = vmatpush2.msra.mxu0 0.0
    %1683 = vmatprep.subr.mxu0 0.0
    %1684 = vmatpush2.msra.mxu0 0.0
    %1685 = vmatprep.subr.mxu0 0.0
    %1686 = vmatpush2.msra.mxu0 0.0
    %1687 = vmatprep.mubr.f32.mxu0 0.0
    %1688 = vmatmul.mubr.f32.gmra.mxu0 %v1621
    %v1689 = vpop.f32.mrf.mxu0
    %v1690 = vadd.f32 %v355, %v1689
    %v1691 = vpop.f32.mrf.mxu0
    %1692 = vdwg.mxu0
    %v1693 = vxor.u32 %v1690, 2147483648
    %v1694 = vmul.f32 %v1693, 1.442695
    %v1695 = vpow.pop %v1694
    %v1696 = vadd.f32 %v1695, 1.0
    %v1697 = vrcp.pop %v1696
    %v1698 = vmul.f32 1.0, %v1697
    %v1699 = vtanh.pop %v1690
    %v1700 = vmul.f32 %v1698, %v1394
    %1702 = vrot.lane.b32.xlu0 %v1699, 32
    %v1703 = vpop.permute.xlu0 %1702
    %v1705 = vmul.f32 %v1698, %v1703
    %1707 = vrot.lane.b32.xlu0 %v1705, 32
    %v1708 = vpop.permute.xlu0 %1707
    %v1710 = vadd.f32 %v1700, %v1708
    %v1711 = vtanh.pop %v1710
    %1713 = vrot.lane.b32.xlu0 %v1711, 32
    %v1714 = vpop.permute.xlu0 %1713
    %v1716 = vmul.f32 %v1698, %v1714
    %v1719 = vunpack.c.l.s4 1983009808
    %v1720 = vunpack.c.0.s8 %v1719
    %v1721 = vlaneseq
    %v1722 = vshrl.u32 %v1721, 7
    %v1723 = vsub.s32 %v1720, %v1722
    %v1724 = vrot.slane %v1716, %v1723
    %1725 = vrot.lane.b32.xlu0 %v1724, 64
    %v1726 = vpop.permute.xlu0 %1725
    %1728 = vst.msk [vmem:[#allocation4 + $0x2] sm:$0x3] %vm474, %v1726
    %v1729 = vld [vmem:[%s0] sm:$0x3]
    %v1730 = vlaneseq
    %v1731 = vshrl.u32 %v1730, 7
    %v1732 = vsub.s32 0, %v1731
    %v1733 = vrot.slane %v1716, %v1732
    %s1735 = sor.u32 256, 64
    %1736 = vbcast.lane.b32.xlu0 %v1733, %s1735
    %v1737 = vpop.permute.xlu0 %1736
    %s1739 = sor.u32 256, 72
    %1740 = vbcast.lane.b32.xlu0 %v1733, %s1739
    %v1741 = vpop.permute.xlu0 %1740
    %s1743 = sor.u32 256, 80
    %1744 = vbcast.lane.b32.xlu0 %v1733, %s1743
    %v1745 = vpop.permute.xlu0 %1744
    %s1747 = sor.u32 256, 88
    %1748 = vbcast.lane.b32.xlu0 %v1733, %s1747
    %v1749 = vpop.permute.xlu0 %1748
    %v1750 = vlaneseq
    %v1751 = vshrl.u32 %v1750, 7
    %v1752 = vsub.s32 1, %v1751
    %v1753 = vrot.slane %v1716, %v1752
    %s1755 = sor.u32 256, 64
    %1756 = vbcast.lane.b32.xlu0 %v1753, %s1755
    %v1757 = vpop.permute.xlu0 %1756
    %s1759 = sor.u32 256, 72
    %1760 = vbcast.lane.b32.xlu0 %v1753, %s1759
    %v1761 = vpop.permute.xlu0 %1760
    %s1763 = sor.u32 256, 80
    %1764 = vbcast.lane.b32.xlu0 %v1753, %s1763
    %v1765 = vpop.permute.xlu0 %1764
    %s1767 = sor.u32 256, 88
    %1768 = vbcast.lane.b32.xlu0 %v1753, %s1767
    %v1769 = vpop.permute.xlu0 %1768
    %v1770 = vmul.f32 %v1737, %v18
    %v1771 = vmul.f32 %v1741, %v19
    %v1772 = vmul.f32 %v1745, %v20
    %v1773 = vmul.f32 %v1749, %v21
    %v1774 = vmul.f32 %v1757, %v22
    %v1775 = vmul.f32 %v1761, %v23
    %v1776 = vmul.f32 %v1765, %v24
    %v1777 = vmul.f32 %v1769, %v25
    %v1778 = vsel %vm183, %v1770, 0.0
    %v1779 = vsel %vm183, %v1771, 0.0
    %v1780 = vadd.f32 %v1778, %v1779
    %v1781 = vsel %vm183, %v1772, 0.0
    %v1782 = vadd.f32 %v1780, %v1781
    %v1783 = vsel %vm183, %v1773, 0.0
    %v1784 = vadd.f32 %v1782, %v1783
    %v1785 = vrot.slane %v1784, 4
    %v1786 = vadd.f32 %v1784, %v1785
    %v1787 = vrot.slane %v1786, 2
    %v1788 = vadd.f32 %v1786, %v1787
    %v1789 = vrot.slane %v1788, 1
    %v1790 = vadd.f32 %v1788, %v1789
    %v1791 = vsel %vm183, %v1774, 0.0
    %v1792 = vsel %vm183, %v1775, 0.0
    %v1793 = vadd.f32 %v1791, %v1792
    %v1794 = vsel %vm183, %v1776, 0.0
    %v1795 = vadd.f32 %v1793, %v1794
    %v1796 = vsel %vm183, %v1777, 0.0
    %v1797 = vadd.f32 %v1795, %v1796
    %v1798 = vrot.slane %v1797, 4
    %v1799 = vadd.f32 %v1797, %v1798
    %v1800 = vrot.slane %v1799, 2
    %v1801 = vadd.f32 %v1799, %v1800
    %v1802 = vrot.slane %v1801, 1
    %v1803 = vadd.f32 %v1801, %v1802
    %v1804 = vmul.f32 %v1790, 0.17677669
    %v1805 = vmul.f32 %v1803, 0.17677669
    %v1808 = vsel %vm214, %v1805, %v1804
    %v1810 = vsel %vm217, %v1808, -inf
    %1811 = vmax.xlane.f32.xlu0 %v1810
    %v1812 = vpop.xlane.xlu0 %1811
    %v1814 = vrot.slane %v1812, 1
    %v1817 = vsub.f32 %v1804, %v1812
    %v1818 = vsub.f32 %v1805, %v1814
    %v1819 = vmul.f32 %v1817, 1.442695
    %v1820 = vpow.pop %v1819
    %v1821 = vmul.f32 %v1818, 1.442695
    %v1822 = vpow.pop %v1821
    %v1825 = vrot.slane %v1822, 7
    %v1826 = vsel %vm214, %v1825, %v1820
    %v1828 = vsel %vm217, %v1826, 0.0
    %1829 = vadd.xlane.f32.xlu0 %v1828
    %v1830 = vpop.xlane.xlu0 %1829
    %v1831 = vrcp.pop %v1830
    %v1833 = vrot.slane %v1831, 1
    %v1836 = vmul.f32 %v1820, %v1831
    %v1837 = vmul.f32 %v1822, %v1833
    %v1838 = vlaneseq
    %v1839 = vshrl.u32 %v1838, 7
    %v1840 = vsub.s32 0, %v1839
    %v1841 = vrot.slane %v1836, %v1840
    %v1842 = vlaneseq
    %v1843 = vshrl.u32 %v1842, 7
    %v1844 = vsub.s32 0, %v1843
    %v1845 = vrot.slane %v1837, %v1844
    %v1846 = vmul.f32 %v18, %v1841
    %v1847 = vmul.f32 %v19, %v1841
    %v1848 = vmul.f32 %v20, %v1841
    %v1849 = vmul.f32 %v21, %v1841
    %v1850 = vmul.f32 %v22, %v1845
    %v1851 = vmul.f32 %v23, %v1845
    %v1852 = vmul.f32 %v24, %v1845
    %v1853 = vmul.f32 %v25, %v1845
    %v1854 = vsel %vm183, %v1846, 0.0
    %1855 = vadd.xlane.f32.xlu0 %v1854
    %v1856 = vpop.xlane.xlu0 %1855
    %v1857 = vsel %vm183, %v1847, 0.0
    %1858 = vadd.xlane.f32.xlu0 %v1857
    %v1859 = vpop.xlane.xlu0 %1858
    %v1860 = vsel %vm183, %v1848, 0.0
    %1861 = vadd.xlane.f32.xlu0 %v1860
    %v1862 = vpop.xlane.xlu0 %1861
    %v1863 = vsel %vm183, %v1849, 0.0
    %1864 = vadd.xlane.f32.xlu0 %v1863
    %v1865 = vpop.xlane.xlu0 %1864
    %v1866 = vsel %vm183, %v1850, 0.0
    %1867 = vadd.xlane.f32.xlu0 %v1866
    %v1868 = vpop.xlane.xlu0 %1867
    %v1869 = vsel %vm183, %v1851, 0.0
    %1870 = vadd.xlane.f32.xlu0 %v1869
    %v1871 = vpop.xlane.xlu0 %1870
    %v1872 = vsel %vm183, %v1852, 0.0
    %1873 = vadd.xlane.f32.xlu0 %v1872
    %v1874 = vpop.xlane.xlu0 %1873
    %v1875 = vsel %vm183, %v1853, 0.0
    %1876 = vadd.xlane.f32.xlu0 %v1875
    %v1877 = vpop.xlane.xlu0 %1876
    %1879 = vrot.lane.b32.xlu0 %v1729, 108
    %v1880 = vpop.permute.xlu0 %1879
    %1882 = vrot.lane.b32.xlu0 %v1716, 68
    %v1883 = vpop.permute.xlu0 %1882
    %v1893 = vlaneseq
    %v1894 = vshrl.u32 %v1893, 7
    %v1895 = vsub.s32 %v300, %v1894
    %v1896 = vrot.slane %v1856, %v1895
    %v1897 = vlaneseq
    %v1898 = vshrl.u32 %v1897, 7
    %v1899 = vsub.s32 %v305, %v1898
    %v1900 = vrot.slane %v1859, %v1899
    %v1901 = vsel %vm310, %v1900, %v1896
    %v1902 = vlaneseq
    %v1903 = vshrl.u32 %v1902, 7
    %v1904 = vsub.s32 %v312, %v1903
    %v1905 = vrot.slane %v1862, %v1904
    %v1906 = vsel %vm317, %v1905, %v1901
    %v1907 = vlaneseq
    %v1908 = vshrl.u32 %v1907, 7
    %v1909 = vsub.s32 %v319, %v1908
    %v1910 = vrot.slane %v1865, %v1909
    %v1911 = vsel %vm324, %v1910, %v1906
    %v1912 = vlaneseq
    %v1913 = vshrl.u32 %v1912, 7
    %v1914 = vsub.s32 %v300, %v1913
    %v1915 = vrot.slane %v1868, %v1914
    %v1916 = vlaneseq
    %v1917 = vshrl.u32 %v1916, 7
    %v1918 = vsub.s32 %v305, %v1917
    %v1919 = vrot.slane %v1871, %v1918
    %v1920 = vsel %vm310, %v1919, %v1915
    %v1921 = vlaneseq
    %v1922 = vshrl.u32 %v1921, 7
    %v1923 = vsub.s32 %v312, %v1922
    %v1924 = vrot.slane %v1874, %v1923
    %v1925 = vsel %vm317, %v1924, %v1920
    %v1926 = vlaneseq
    %v1927 = vshrl.u32 %v1926, 7
    %v1928 = vsub.s32 %v319, %v1927
    %v1929 = vrot.slane %v1877, %v1928
    %v1930 = vsel %vm324, %v1929, %v1925
    %v1931 = vsel %vm214, %v1930, %v1911
    %v1933 = vsel %vm347, %v1880, %v1883
    %v1934 = vsel %vm349, %v1933, %v1931
    %v1936 = vsel %vm357, %v1934, 0
    %1938 = vmatprep.subr.mxu0 0.0
    %1939 = vmatpush1.msra.mxu0 0.0
    %1940 = vmatprep.subr.mxu0 0.0
    %1941 = vmatpush1.msra.mxu0 0.0
    %1942 = vmatprep.subr.mxu0 0.0
    %1943 = vmatpush1.msra.mxu0 0.0
    %1944 = vmatprep.subr.mxu0 0.0
    %1945 = vmatpush1.msra.mxu0 0.0
    %1946 = vmatprep.subr.mxu0 0.0
    %1947 = vmatpush1.msra.mxu0 0.0
    %1948 = vmatprep.subr.mxu0 0.0
    %1949 = vmatpush1.msra.mxu0 0.0
    %1950 = vmatprep.subr.mxu0 0.0
    %1951 = vmatpush1.msra.mxu0 0.0
    %1952 = vmatprep.subr.mxu0 0.0
    %1953 = vmatpush1.msra.mxu0 %v363
    %1954 = vmatprep.subr.mxu0 0.0
    %1955 = vmatpush1.msra.mxu0 %v33
    %1956 = vmatprep.subr.mxu0 0.0
    %1957 = vmatpush1.msra.mxu0 %v32
    %1958 = vmatprep.subr.mxu0 0.0
    %1959 = vmatpush1.msra.mxu0 %v31
    %1960 = vmatprep.subr.mxu0 0.0
    %1961 = vmatpush1.msra.mxu0 %v30
    %1962 = vmatprep.subr.mxu0 0.0
    %1963 = vmatpush1.msra.mxu0 %v29
    %1964 = vmatprep.subr.mxu0 0.0
    %1965 = vmatpush1.msra.mxu0 %v28
    %1966 = vmatprep.subr.mxu0 0.0
    %1967 = vmatpush1.msra.mxu0 %v27
    %1968 = vmatprep.subr.mxu0 0.0
    %1969 = vmatpush1.msra.mxu0 %v26
    %1970 = vmatprep.subr.mxu0 0.0
    %1971 = vmatpush2.msra.mxu0 0.0
    %1972 = vmatprep.subr.mxu0 0.0
    %1973 = vmatpush2.msra.mxu0 0.0
    %1974 = vmatprep.subr.mxu0 0.0
    %1975 = vmatpush2.msra.mxu0 0.0
    %1976 = vmatprep.subr.mxu0 0.0
    %1977 = vmatpush2.msra.mxu0 0.0
    %1978 = vmatprep.subr.mxu0 0.0
    %1979 = vmatpush2.msra.mxu0 0.0
    %1980 = vmatprep.subr.mxu0 0.0
    %1981 = vmatpush2.msra.mxu0 0.0
    %1982 = vmatprep.subr.mxu0 0.0
    %1983 = vmatpush2.msra.mxu0 0.0
    %1984 = vmatprep.subr.mxu0 0.0
    %1985 = vmatpush2.msra.mxu0 0.0
    %1986 = vmatprep.subr.mxu0 0.0
    %1987 = vmatpush2.msra.mxu0 0.0
    %1988 = vmatprep.subr.mxu0 0.0
    %1989 = vmatpush2.msra.mxu0 0.0
    %1990 = vmatprep.subr.mxu0 0.0
    %1991 = vmatpush2.msra.mxu0 0.0
    %1992 = vmatprep.subr.mxu0 0.0
    %1993 = vmatpush2.msra.mxu0 0.0
    %1994 = vmatprep.subr.mxu0 0.0
    %1995 = vmatpush2.msra.mxu0 0.0
    %1996 = vmatprep.subr.mxu0 0.0
    %1997 = vmatpush2.msra.mxu0 0.0
    %1998 = vmatprep.subr.mxu0 0.0
    %1999 = vmatpush2.msra.mxu0 0.0
    %2000 = vmatprep.subr.mxu0 0.0
    %2001 = vmatpush2.msra.mxu0 0.0
    %2002 = vmatprep.mubr.f32.mxu0 0.0
    %2003 = vmatmul.mubr.f32.gmra.mxu0 %v1936
    %v2004 = vpop.f32.mrf.mxu0
    %v2005 = vadd.f32 %v355, %v2004
    %v2006 = vpop.f32.mrf.mxu0
    %2007 = vdwg.mxu0
    %v2008 = vxor.u32 %v2005, 2147483648
    %v2009 = vmul.f32 %v2008, 1.442695
    %v2010 = vpow.pop %v2009
    %v2011 = vadd.f32 %v2010, 1.0
    %v2012 = vrcp.pop %v2011
    %v2013 = vmul.f32 1.0, %v2012
    %v2014 = vtanh.pop %v2005
    %v2015 = vmul.f32 %v2013, %v1710
    %2017 = vrot.lane.b32.xlu0 %v2014, 32
    %v2018 = vpop.permute.xlu0 %2017
    %v2020 = vmul.f32 %v2013, %v2018
    %2022 = vrot.lane.b32.xlu0 %v2020, 32
    %v2023 = vpop.permute.xlu0 %2022
    %v2025 = vadd.f32 %v2015, %v2023
    %v2026 = vtanh.pop %v2025
    %2028 = vrot.lane.b32.xlu0 %v2026, 32
    %v2029 = vpop.permute.xlu0 %2028
    %v2031 = vmul.f32 %v2013, %v2029
    %v2034 = vunpack.c.l.s4 1983009808
    %v2035 = vunpack.c.0.s8 %v2034
    %v2036 = vlaneseq
    %v2037 = vshrl.u32 %v2036, 7
    %v2038 = vsub.s32 %v2035, %v2037
    %v2039 = vrot.slane %v2031, %v2038
    %2040 = vrot.lane.b32.xlu0 %v2039, 96
    %v2041 = vpop.permute.xlu0 %2040
    %2043 = vst.msk [vmem:[#allocation4 + $0x2] sm:$0x3] %vm790, %v2041
    %v2044 = vld [vmem:[%s0] sm:$0x3]
    %v2045 = vlaneseq
    %v2046 = vshrl.u32 %v2045, 7
    %v2047 = vsub.s32 0, %v2046
    %v2048 = vrot.slane %v2031, %v2047
    %s2050 = sor.u32 256, 64
    %2051 = vbcast.lane.b32.xlu0 %v2048, %s2050
    %v2052 = vpop.permute.xlu0 %2051
    %s2054 = sor.u32 256, 72
    %2055 = vbcast.lane.b32.xlu0 %v2048, %s2054
    %v2056 = vpop.permute.xlu0 %2055
    %s2058 = sor.u32 256, 80
    %2059 = vbcast.lane.b32.xlu0 %v2048, %s2058
    %v2060 = vpop.permute.xlu0 %2059
    %s2062 = sor.u32 256, 88
    %2063 = vbcast.lane.b32.xlu0 %v2048, %s2062
    %v2064 = vpop.permute.xlu0 %2063
    %v2065 = vlaneseq
    %v2066 = vshrl.u32 %v2065, 7
    %v2067 = vsub.s32 1, %v2066
    %v2068 = vrot.slane %v2031, %v2067
    %s2070 = sor.u32 256, 64
    %2071 = vbcast.lane.b32.xlu0 %v2068, %s2070
    %v2072 = vpop.permute.xlu0 %2071
    %s2074 = sor.u32 256, 72
    %2075 = vbcast.lane.b32.xlu0 %v2068, %s2074
    %v2076 = vpop.permute.xlu0 %2075
    %s2078 = sor.u32 256, 80
    %2079 = vbcast.lane.b32.xlu0 %v2068, %s2078
    %v2080 = vpop.permute.xlu0 %2079
    %s2082 = sor.u32 256, 88
    %2083 = vbcast.lane.b32.xlu0 %v2068, %s2082
    %v2084 = vpop.permute.xlu0 %2083
    %v2085 = vmul.f32 %v2052, %v18
    %v2086 = vmul.f32 %v2056, %v19
    %v2087 = vmul.f32 %v2060, %v20
    %v2088 = vmul.f32 %v2064, %v21
    %v2089 = vmul.f32 %v2072, %v22
    %v2090 = vmul.f32 %v2076, %v23
    %v2091 = vmul.f32 %v2080, %v24
    %v2092 = vmul.f32 %v2084, %v25
    %v2093 = vsel %vm183, %v2085, 0.0
    %v2094 = vsel %vm183, %v2086, 0.0
    %v2095 = vadd.f32 %v2093, %v2094
    %v2096 = vsel %vm183, %v2087, 0.0
    %v2097 = vadd.f32 %v2095, %v2096
    %v2098 = vsel %vm183, %v2088, 0.0
    %v2099 = vadd.f32 %v2097, %v2098
    %v2100 = vrot.slane %v2099, 4
    %v2101 = vadd.f32 %v2099, %v2100
    %v2102 = vrot.slane %v2101, 2
    %v2103 = vadd.f32 %v2101, %v2102
    %v2104 = vrot.slane %v2103, 1
    %v2105 = vadd.f32 %v2103, %v2104
    %v2106 = vsel %vm183, %v2089, 0.0
    %v2107 = vsel %vm183, %v2090, 0.0
    %v2108 = vadd.f32 %v2106, %v2107
    %v2109 = vsel %vm183, %v2091, 0.0
    %v2110 = vadd.f32 %v2108, %v2109
    %v2111 = vsel %vm183, %v2092, 0.0
    %v2112 = vadd.f32 %v2110, %v2111
    %v2113 = vrot.slane %v2112, 4
    %v2114 = vadd.f32 %v2112, %v2113
    %v2115 = vrot.slane %v2114, 2
    %v2116 = vadd.f32 %v2114, %v2115
    %v2117 = vrot.slane %v2116, 1
    %v2118 = vadd.f32 %v2116, %v2117
    %v2119 = vmul.f32 %v2105, 0.17677669
    %v2120 = vmul.f32 %v2118, 0.17677669
    %v2123 = vsel %vm214, %v2120, %v2119
    %v2125 = vsel %vm217, %v2123, -inf
    %2126 = vmax.xlane.f32.xlu0 %v2125
    %v2127 = vpop.xlane.xlu0 %2126
    %v2129 = vrot.slane %v2127, 1
    %v2132 = vsub.f32 %v2119, %v2127
    %v2133 = vsub.f32 %v2120, %v2129
    %v2134 = vmul.f32 %v2132, 1.442695
    %v2135 = vpow.pop %v2134
    %v2136 = vmul.f32 %v2133, 1.442695
    %v2137 = vpow.pop %v2136
    %v2140 = vrot.slane %v2137, 7
    %v2141 = vsel %vm214, %v2140, %v2135
    %v2143 = vsel %vm217, %v2141, 0.0
    %2144 = vadd.xlane.f32.xlu0 %v2143
    %v2145 = vpop.xlane.xlu0 %2144
    %v2146 = vrcp.pop %v2145
    %v2148 = vrot.slane %v2146, 1
    %v2151 = vmul.f32 %v2135, %v2146
    %v2152 = vmul.f32 %v2137, %v2148
    %v2153 = vlaneseq
    %v2154 = vshrl.u32 %v2153, 7
    %v2155 = vsub.s32 0, %v2154
    %v2156 = vrot.slane %v2151, %v2155
    %v2157 = vlaneseq
    %v2158 = vshrl.u32 %v2157, 7
    %v2159 = vsub.s32 0, %v2158
    %v2160 = vrot.slane %v2152, %v2159
    %v2161 = vmul.f32 %v18, %v2156
    %v2162 = vmul.f32 %v19, %v2156
    %v2163 = vmul.f32 %v20, %v2156
    %v2164 = vmul.f32 %v21, %v2156
    %v2165 = vmul.f32 %v22, %v2160
    %v2166 = vmul.f32 %v23, %v2160
    %v2167 = vmul.f32 %v24, %v2160
    %v2168 = vmul.f32 %v25, %v2160
    %v2169 = vsel %vm183, %v2161, 0.0
    %2170 = vadd.xlane.f32.xlu0 %v2169
    %v2171 = vpop.xlane.xlu0 %2170
    %v2172 = vsel %vm183, %v2162, 0.0
    %2173 = vadd.xlane.f32.xlu0 %v2172
    %v2174 = vpop.xlane.xlu0 %2173
    %v2175 = vsel %vm183, %v2163, 0.0
    %2176 = vadd.xlane.f32.xlu0 %v2175
    %v2177 = vpop.xlane.xlu0 %2176
    %v2178 = vsel %vm183, %v2164, 0.0
    %2179 = vadd.xlane.f32.xlu0 %v2178
    %v2180 = vpop.xlane.xlu0 %2179
    %v2181 = vsel %vm183, %v2165, 0.0
    %2182 = vadd.xlane.f32.xlu0 %v2181
    %v2183 = vpop.xlane.xlu0 %2182
    %v2184 = vsel %vm183, %v2166, 0.0
    %2185 = vadd.xlane.f32.xlu0 %v2184
    %v2186 = vpop.xlane.xlu0 %2185
    %v2187 = vsel %vm183, %v2167, 0.0
    %2188 = vadd.xlane.f32.xlu0 %v2187
    %v2189 = vpop.xlane.xlu0 %2188
    %v2190 = vsel %vm183, %v2168, 0.0
    %2191 = vadd.xlane.f32.xlu0 %v2190
    %v2192 = vpop.xlane.xlu0 %2191
    %2194 = vrot.lane.b32.xlu0 %v2044, 104
    %v2195 = vpop.permute.xlu0 %2194
    %2197 = vrot.lane.b32.xlu0 %v2031, 68
    %v2198 = vpop.permute.xlu0 %2197
    %v2208 = vlaneseq
    %v2209 = vshrl.u32 %v2208, 7
    %v2210 = vsub.s32 %v300, %v2209
    %v2211 = vrot.slane %v2171, %v2210
    %v2212 = vlaneseq
    %v2213 = vshrl.u32 %v2212, 7
    %v2214 = vsub.s32 %v305, %v2213
    %v2215 = vrot.slane %v2174, %v2214
    %v2216 = vsel %vm310, %v2215, %v2211
    %v2217 = vlaneseq
    %v2218 = vshrl.u32 %v2217, 7
    %v2219 = vsub.s32 %v312, %v2218
    %v2220 = vrot.slane %v2177, %v2219
    %v2221 = vsel %vm317, %v2220, %v2216
    %v2222 = vlaneseq
    %v2223 = vshrl.u32 %v2222, 7
    %v2224 = vsub.s32 %v319, %v2223
    %v2225 = vrot.slane %v2180, %v2224
    %v2226 = vsel %vm324, %v2225, %v2221
    %v2227 = vlaneseq
    %v2228 = vshrl.u32 %v2227, 7
    %v2229 = vsub.s32 %v300, %v2228
    %v2230 = vrot.slane %v2183, %v2229
    %v2231 = vlaneseq
    %v2232 = vshrl.u32 %v2231, 7
    %v2233 = vsub.s32 %v305, %v2232
    %v2234 = vrot.slane %v2186, %v2233
    %v2235 = vsel %vm310, %v2234, %v2230
    %v2236 = vlaneseq
    %v2237 = vshrl.u32 %v2236, 7
    %v2238 = vsub.s32 %v312, %v2237
    %v2239 = vrot.slane %v2189, %v2238
    %v2240 = vsel %vm317, %v2239, %v2235
    %v2241 = vlaneseq
    %v2242 = vshrl.u32 %v2241, 7
    %v2243 = vsub.s32 %v319, %v2242
    %v2244 = vrot.slane %v2192, %v2243
    %v2245 = vsel %vm324, %v2244, %v2240
    %v2246 = vsel %vm214, %v2245, %v2226
    %v2248 = vsel %vm347, %v2195, %v2198
    %v2249 = vsel %vm349, %v2248, %v2246
    %v2251 = vsel %vm357, %v2249, 0
    %2253 = vmatprep.subr.mxu0 0.0
    %2254 = vmatpush1.msra.mxu0 0.0
    %2255 = vmatprep.subr.mxu0 0.0
    %2256 = vmatpush1.msra.mxu0 0.0
    %2257 = vmatprep.subr.mxu0 0.0
    %2258 = vmatpush1.msra.mxu0 0.0
    %2259 = vmatprep.subr.mxu0 0.0
    %2260 = vmatpush1.msra.mxu0 0.0
    %2261 = vmatprep.subr.mxu0 0.0
    %2262 = vmatpush1.msra.mxu0 0.0
    %2263 = vmatprep.subr.mxu0 0.0
    %2264 = vmatpush1.msra.mxu0 0.0
    %2265 = vmatprep.subr.mxu0 0.0
    %2266 = vmatpush1.msra.mxu0 0.0
    %2267 = vmatprep.subr.mxu0 0.0
    %2268 = vmatpush1.msra.mxu0 %v363
    %2269 = vmatprep.subr.mxu0 0.0
    %2270 = vmatpush1.msra.mxu0 %v33
    %2271 = vmatprep.subr.mxu0 0.0
    %2272 = vmatpush1.msra.mxu0 %v32
    %2273 = vmatprep.subr.mxu0 0.0
    %2274 = vmatpush1.msra.mxu0 %v31
    %2275 = vmatprep.subr.mxu0 0.0
    %2276 = vmatpush1.msra.mxu0 %v30
    %2277 = vmatprep.subr.mxu0 0.0
    %2278 = vmatpush1.msra.mxu0 %v29
    %2279 = vmatprep.subr.mxu0 0.0
    %2280 = vmatpush1.msra.mxu0 %v28
    %2281 = vmatprep.subr.mxu0 0.0
    %2282 = vmatpush1.msra.mxu0 %v27
    %2283 = vmatprep.subr.mxu0 0.0
    %2284 = vmatpush1.msra.mxu0 %v26
    %2285 = vmatprep.subr.mxu0 0.0
    %2286 = vmatpush2.msra.mxu0 0.0
    %2287 = vmatprep.subr.mxu0 0.0
    %2288 = vmatpush2.msra.mxu0 0.0
    %2289 = vmatprep.subr.mxu0 0.0
    %2290 = vmatpush2.msra.mxu0 0.0
    %2291 = vmatprep.subr.mxu0 0.0
    %2292 = vmatpush2.msra.mxu0 0.0
    %2293 = vmatprep.subr.mxu0 0.0
    %2294 = vmatpush2.msra.mxu0 0.0
    %2295 = vmatprep.subr.mxu0 0.0
    %2296 = vmatpush2.msra.mxu0 0.0
    %2297 = vmatprep.subr.mxu0 0.0
    %2298 = vmatpush2.msra.mxu0 0.0
    %2299 = vmatprep.subr.mxu0 0.0
    %2300 = vmatpush2.msra.mxu0 0.0
    %2301 = vmatprep.subr.mxu0 0.0
    %2302 = vmatpush2.msra.mxu0 0.0
    %2303 = vmatprep.subr.mxu0 0.0
    %2304 = vmatpush2.msra.mxu0 0.0
    %2305 = vmatprep.subr.mxu0 0.0
    %2306 = vmatpush2.msra.mxu0 0.0
    %2307 = vmatprep.subr.mxu0 0.0
    %2308 = vmatpush2.msra.mxu0 0.0
    %2309 = vmatprep.subr.mxu0 0.0
    %2310 = vmatpush2.msra.mxu0 0.0
    %2311 = vmatprep.subr.mxu0 0.0
    %2312 = vmatpush2.msra.mxu0 0.0
    %2313 = vmatprep.subr.mxu0 0.0
    %2314 = vmatpush2.msra.mxu0 0.0
    %2315 = vmatprep.subr.mxu0 0.0
    %2316 = vmatpush2.msra.mxu0 0.0
    %2317 = vmatprep.mubr.f32.mxu0 0.0
    %2318 = vmatmul.mubr.f32.gmra.mxu0 %v2251
    %v2319 = vpop.f32.mrf.mxu0
    %v2320 = vadd.f32 %v355, %v2319
    %v2321 = vpop.f32.mrf.mxu0
    %2322 = vdwg.mxu0
    %v2323 = vxor.u32 %v2320, 2147483648
    %v2324 = vmul.f32 %v2323, 1.442695
    %v2325 = vpow.pop %v2324
    %v2326 = vadd.f32 %v2325, 1.0
    %v2327 = vrcp.pop %v2326
    %v2328 = vmul.f32 1.0, %v2327
    %v2329 = vtanh.pop %v2320
    %v2330 = vmul.f32 %v2328, %v2025
    %2332 = vrot.lane.b32.xlu0 %v2329, 32
    %v2333 = vpop.permute.xlu0 %2332
    %v2335 = vmul.f32 %v2328, %v2333
    %2337 = vrot.lane.b32.xlu0 %v2335, 32
    %v2338 = vpop.permute.xlu0 %2337
    %v2340 = vadd.f32 %v2330, %v2338
    %v2341 = vtanh.pop %v2340
    %2343 = vrot.lane.b32.xlu0 %v2341, 32
    %v2344 = vpop.permute.xlu0 %2343
    %v2346 = vmul.f32 %v2328, %v2344
    %2347 = vst.msk [vmem:[#allocation4 + $0x2] sm:$0x3] %vm1095, %v2346
    %v2348 = vld [vmem:[%s0] sm:$0x3]
    %v2349 = vlaneseq
    %v2350 = vshrl.u32 %v2349, 7
    %v2351 = vsub.s32 0, %v2350
    %v2352 = vrot.slane %v2346, %v2351
    %s2354 = sor.u32 256, 64
    %2355 = vbcast.lane.b32.xlu0 %v2352, %s2354
    %v2356 = vpop.permute.xlu0 %2355
    %s2358 = sor.u32 256, 72
    %2359 = vbcast.lane.b32.xlu0 %v2352, %s2358
    %v2360 = vpop.permute.xlu0 %2359
    %s2362 = sor.u32 256, 80
    %2363 = vbcast.lane.b32.xlu0 %v2352, %s2362
    %v2364 = vpop.permute.xlu0 %2363
    %s2366 = sor.u32 256, 88
    %2367 = vbcast.lane.b32.xlu0 %v2352, %s2366
    %v2368 = vpop.permute.xlu0 %2367
    %v2369 = vlaneseq
    %v2370 = vshrl.u32 %v2369, 7
    %v2371 = vsub.s32 1, %v2370
    %v2372 = vrot.slane %v2346, %v2371
    %s2374 = sor.u32 256, 64
    %2375 = vbcast.lane.b32.xlu0 %v2372, %s2374
    %v2376 = vpop.permute.xlu0 %2375
    %s2378 = sor.u32 256, 72
    %2379 = vbcast.lane.b32.xlu0 %v2372, %s2378
    %v2380 = vpop.permute.xlu0 %2379
    %s2382 = sor.u32 256, 80
    %2383 = vbcast.lane.b32.xlu0 %v2372, %s2382
    %v2384 = vpop.permute.xlu0 %2383
    %s2386 = sor.u32 256, 88
    %2387 = vbcast.lane.b32.xlu0 %v2372, %s2386
    %v2388 = vpop.permute.xlu0 %2387
    %v2389 = vmul.f32 %v2356, %v18
    %v2390 = vmul.f32 %v2360, %v19
    %v2391 = vmul.f32 %v2364, %v20
    %v2392 = vmul.f32 %v2368, %v21
    %v2393 = vmul.f32 %v2376, %v22
    %v2394 = vmul.f32 %v2380, %v23
    %v2395 = vmul.f32 %v2384, %v24
    %v2396 = vmul.f32 %v2388, %v25
    %v2397 = vsel %vm183, %v2389, 0.0
    %v2398 = vsel %vm183, %v2390, 0.0
    %v2399 = vadd.f32 %v2397, %v2398
    %v2400 = vsel %vm183, %v2391, 0.0
    %v2401 = vadd.f32 %v2399, %v2400
    %v2402 = vsel %vm183, %v2392, 0.0
    %v2403 = vadd.f32 %v2401, %v2402
    %v2404 = vrot.slane %v2403, 4
    %v2405 = vadd.f32 %v2403, %v2404
    %v2406 = vrot.slane %v2405, 2
    %v2407 = vadd.f32 %v2405, %v2406
    %v2408 = vrot.slane %v2407, 1
    %v2409 = vadd.f32 %v2407, %v2408
    %v2410 = vsel %vm183, %v2393, 0.0
    %v2411 = vsel %vm183, %v2394, 0.0
    %v2412 = vadd.f32 %v2410, %v2411
    %v2413 = vsel %vm183, %v2395, 0.0
    %v2414 = vadd.f32 %v2412, %v2413
    %v2415 = vsel %vm183, %v2396, 0.0
    %v2416 = vadd.f32 %v2414, %v2415
    %v2417 = vrot.slane %v2416, 4
    %v2418 = vadd.f32 %v2416, %v2417
    %v2419 = vrot.slane %v2418, 2
    %v2420 = vadd.f32 %v2418, %v2419
    %v2421 = vrot.slane %v2420, 1
    %v2422 = vadd.f32 %v2420, %v2421
    %v2423 = vmul.f32 %v2409, 0.17677669
    %v2424 = vmul.f32 %v2422, 0.17677669
    %v2427 = vsel %vm214, %v2424, %v2423
    %v2429 = vsel %vm217, %v2427, -inf
    %2430 = vmax.xlane.f32.xlu0 %v2429
    %v2431 = vpop.xlane.xlu0 %2430
    %v2433 = vrot.slane %v2431, 1
    %v2436 = vsub.f32 %v2423, %v2431
    %v2437 = vsub.f32 %v2424, %v2433
    %v2438 = vmul.f32 %v2436, 1.442695
    %v2439 = vpow.pop %v2438
    %v2440 = vmul.f32 %v2437, 1.442695
    %v2441 = vpow.pop %v2440
    %v2444 = vrot.slane %v2441, 7
    %v2445 = vsel %vm214, %v2444, %v2439
    %v2447 = vsel %vm217, %v2445, 0.0
    %2448 = vadd.xlane.f32.xlu0 %v2447
    %v2449 = vpop.xlane.xlu0 %2448
    %v2450 = vrcp.pop %v2449
    %v2452 = vrot.slane %v2450, 1
    %v2455 = vmul.f32 %v2439, %v2450
    %v2456 = vmul.f32 %v2441, %v2452
    %v2457 = vlaneseq
    %v2458 = vshrl.u32 %v2457, 7
    %v2459 = vsub.s32 0, %v2458
    %v2460 = vrot.slane %v2455, %v2459
    %v2461 = vlaneseq
    %v2462 = vshrl.u32 %v2461, 7
    %v2463 = vsub.s32 0, %v2462
    %v2464 = vrot.slane %v2456, %v2463
    %v2465 = vmul.f32 %v18, %v2460
    %v2466 = vmul.f32 %v19, %v2460
    %v2467 = vmul.f32 %v20, %v2460
    %v2468 = vmul.f32 %v21, %v2460
    %v2469 = vmul.f32 %v22, %v2464
    %v2470 = vmul.f32 %v23, %v2464
    %v2471 = vmul.f32 %v24, %v2464
    %v2472 = vmul.f32 %v25, %v2464
    %v2473 = vsel %vm183, %v2465, 0.0
    %2474 = vadd.xlane.f32.xlu0 %v2473
    %v2475 = vpop.xlane.xlu0 %2474
    %v2476 = vsel %vm183, %v2466, 0.0
    %2477 = vadd.xlane.f32.xlu0 %v2476
    %v2478 = vpop.xlane.xlu0 %2477
    %v2479 = vsel %vm183, %v2467, 0.0
    %2480 = vadd.xlane.f32.xlu0 %v2479
    %v2481 = vpop.xlane.xlu0 %2480
    %v2482 = vsel %vm183, %v2468, 0.0
    %2483 = vadd.xlane.f32.xlu0 %v2482
    %v2484 = vpop.xlane.xlu0 %2483
    %v2485 = vsel %vm183, %v2469, 0.0
    %2486 = vadd.xlane.f32.xlu0 %v2485
    %v2487 = vpop.xlane.xlu0 %2486
    %v2488 = vsel %vm183, %v2470, 0.0
    %2489 = vadd.xlane.f32.xlu0 %v2488
    %v2490 = vpop.xlane.xlu0 %2489
    %v2491 = vsel %vm183, %v2471, 0.0
    %2492 = vadd.xlane.f32.xlu0 %v2491
    %v2493 = vpop.xlane.xlu0 %2492
    %v2494 = vsel %vm183, %v2472, 0.0
    %2495 = vadd.xlane.f32.xlu0 %v2494
    %v2496 = vpop.xlane.xlu0 %2495
    %2498 = vrot.lane.b32.xlu0 %v2348, 100
    %v2499 = vpop.permute.xlu0 %2498
    %2502 = vrot.lane.b32.xlu0 %v2346, 68
    %v2503 = vpop.permute.xlu0 %2502
    %v2513 = vlaneseq
    %v2514 = vshrl.u32 %v2513, 7
    %v2515 = vsub.s32 %v300, %v2514
    %v2516 = vrot.slane %v2475, %v2515
    %v2517 = vlaneseq
    %v2518 = vshrl.u32 %v2517, 7
    %v2519 = vsub.s32 %v305, %v2518
    %v2520 = vrot.slane %v2478, %v2519
    %v2521 = vsel %vm310, %v2520, %v2516
    %v2522 = vlaneseq
    %v2523 = vshrl.u32 %v2522, 7
    %v2524 = vsub.s32 %v312, %v2523
    %v2525 = vrot.slane %v2481, %v2524
    %v2526 = vsel %vm317, %v2525, %v2521
    %v2527 = vlaneseq
    %v2528 = vshrl.u32 %v2527, 7
    %v2529 = vsub.s32 %v319, %v2528
    %v2530 = vrot.slane %v2484, %v2529
    %v2531 = vsel %vm324, %v2530, %v2526
    %v2532 = vlaneseq
    %v2533 = vshrl.u32 %v2532, 7
    %v2534 = vsub.s32 %v300, %v2533
    %v2535 = vrot.slane %v2487, %v2534
    %v2536 = vlaneseq
    %v2537 = vshrl.u32 %v2536, 7
    %v2538 = vsub.s32 %v305, %v2537
    %v2539 = vrot.slane %v2490, %v2538
    %v2540 = vsel %vm310, %v2539, %v2535
    %v2541 = vlaneseq
    %v2542 = vshrl.u32 %v2541, 7
    %v2543 = vsub.s32 %v312, %v2542
    %v2544 = vrot.slane %v2493, %v2543
    %v2545 = vsel %vm317, %v2544, %v2540
    %v2546 = vlaneseq
    %v2547 = vshrl.u32 %v2546, 7
    %v2548 = vsub.s32 %v319, %v2547
    %v2549 = vrot.slane %v2496, %v2548
    %v2550 = vsel %vm324, %v2549, %v2545
    %v2551 = vsel %vm214, %v2550, %v2531
    %v2553 = vsel %vm347, %v2499, %v2503
    %v2554 = vsel %vm349, %v2553, %v2551
    %v2556 = vsel %vm357, %v2554, 0
    %2558 = vmatprep.subr.mxu0 0.0
    %2559 = vmatpush1.msra.mxu0 0.0
    %2560 = vmatprep.subr.mxu0 0.0
    %2561 = vmatpush1.msra.mxu0 0.0
    %2562 = vmatprep.subr.mxu0 0.0
    %2563 = vmatpush1.msra.mxu0 0.0
    %2564 = vmatprep.subr.mxu0 0.0
    %2565 = vmatpush1.msra.mxu0 0.0
    %2566 = vmatprep.subr.mxu0 0.0
    %2567 = vmatpush1.msra.mxu0 0.0
    %2568 = vmatprep.subr.mxu0 0.0
    %2569 = vmatpush1.msra.mxu0 0.0
    %2570 = vmatprep.subr.mxu0 0.0
    %2571 = vmatpush1.msra.mxu0 0.0
    %2572 = vmatprep.subr.mxu0 0.0
    %2573 = vmatpush1.msra.mxu0 %v363
    %2574 = vmatprep.subr.mxu0 0.0
    %2575 = vmatpush1.msra.mxu0 %v33
    %2576 = vmatprep.subr.mxu0 0.0
    %2577 = vmatpush1.msra.mxu0 %v32
    %2578 = vmatprep.subr.mxu0 0.0
    %2579 = vmatpush1.msra.mxu0 %v31
    %2580 = vmatprep.subr.mxu0 0.0
    %2581 = vmatpush1.msra.mxu0 %v30
    %2582 = vmatprep.subr.mxu0 0.0
    %2583 = vmatpush1.msra.mxu0 %v29
    %2584 = vmatprep.subr.mxu0 0.0
    %2585 = vmatpush1.msra.mxu0 %v28
    %2586 = vmatprep.subr.mxu0 0.0
    %2587 = vmatpush1.msra.mxu0 %v27
    %2588 = vmatprep.subr.mxu0 0.0
    %2589 = vmatpush1.msra.mxu0 %v26
    %2590 = vmatprep.subr.mxu0 0.0
    %2591 = vmatpush2.msra.mxu0 0.0
    %2592 = vmatprep.subr.mxu0 0.0
    %2593 = vmatpush2.msra.mxu0 0.0
    %2594 = vmatprep.subr.mxu0 0.0
    %2595 = vmatpush2.msra.mxu0 0.0
    %2596 = vmatprep.subr.mxu0 0.0
    %2597 = vmatpush2.msra.mxu0 0.0
    %2598 = vmatprep.subr.mxu0 0.0
    %2599 = vmatpush2.msra.mxu0 0.0
    %2600 = vmatprep.subr.mxu0 0.0
    %2601 = vmatpush2.msra.mxu0 0.0
    %2602 = vmatprep.subr.mxu0 0.0
    %2603 = vmatpush2.msra.mxu0 0.0
    %2604 = vmatprep.subr.mxu0 0.0
    %2605 = vmatpush2.msra.mxu0 0.0
    %2606 = vmatprep.subr.mxu0 0.0
    %2607 = vmatpush2.msra.mxu0 0.0
    %2608 = vmatprep.subr.mxu0 0.0
    %2609 = vmatpush2.msra.mxu0 0.0
    %2610 = vmatprep.subr.mxu0 0.0
    %2611 = vmatpush2.msra.mxu0 0.0
    %2612 = vmatprep.subr.mxu0 0.0
    %2613 = vmatpush2.msra.mxu0 0.0
    %2614 = vmatprep.subr.mxu0 0.0
    %2615 = vmatpush2.msra.mxu0 0.0
    %2616 = vmatprep.subr.mxu0 0.0
    %2617 = vmatpush2.msra.mxu0 0.0
    %2618 = vmatprep.subr.mxu0 0.0
    %2619 = vmatpush2.msra.mxu0 0.0
    %2620 = vmatprep.subr.mxu0 0.0
    %2621 = vmatpush2.msra.mxu0 0.0
    %2622 = vmatprep.mubr.f32.mxu0 0.0
    %2623 = vmatmul.mubr.f32.gmra.mxu0 %v2556
    %v2624 = vpop.f32.mrf.mxu0
    %v2625 = vadd.f32 %v355, %v2624
    %v2626 = vpop.f32.mrf.mxu0
    %2627 = vdwg.mxu0
    %v2628 = vxor.u32 %v2625, 2147483648
    %v2629 = vmul.f32 %v2628, 1.442695
    %v2630 = vpow.pop %v2629
    %v2631 = vadd.f32 %v2630, 1.0
    %v2632 = vrcp.pop %v2631
    %v2633 = vmul.f32 1.0, %v2632
    %v2634 = vtanh.pop %v2625
    %v2635 = vmul.f32 %v2633, %v2340
    %2637 = vrot.lane.b32.xlu0 %v2634, 32
    %v2638 = vpop.permute.xlu0 %2637
    %v2640 = vmul.f32 %v2633, %v2638
    %2642 = vrot.lane.b32.xlu0 %v2640, 32
    %v2643 = vpop.permute.xlu0 %2642
    %v2645 = vadd.f32 %v2635, %v2643
    %v2646 = vtanh.pop %v2645
    %2648 = vrot.lane.b32.xlu0 %v2646, 32
    %v2649 = vpop.permute.xlu0 %2648
    %v2651 = vmul.f32 %v2633, %v2649
    %v2654 = vunpack.c.l.s4 1983009808
    %v2655 = vunpack.c.0.s8 %v2654
    %v2656 = vlaneseq
    %v2657 = vshrl.u32 %v2656, 7
    %v2658 = vsub.s32 %v2655, %v2657
    %v2659 = vrot.slane %v2651, %v2658
    %2660 = vrot.lane.b32.xlu0 %v2659, 32
    %v2661 = vpop.permute.xlu0 %2660
    %2663 = vst.msk [vmem:[#allocation4 + $0x2] sm:$0x3] %vm1412, %v2661
    %2664 = vrot.lane.b32.xlu0 %v2651, 64
    %v2665 = vpop.permute.xlu0 %2664
    %2667 = vst.msk [vmem:[#allocation2] sm:$0x3] %vm474, %v2665
    %2669 = vrot.lane.b32.xlu0 %v2645, 96
    %v2670 = vpop.permute.xlu0 %2669
    %2672 = vst.msk [vmem:[#allocation3] sm:$0x3] %vm474, %v2670
    // Predicated region
    $region22: #{tpu_custom_call.1} parent=1 // pred_check
      _
    $region23: #{tpu_custom_call.1} parent=1 // pred_check_branch
      %2674 = sbr.rel (0) target = $region25
    $region24: #{tpu_custom_call.1} parent=1 // pred_region
      %s2676 = ssub.s32 64, 64
      %2677 = vsyncadd [#allocation5], %s2676
      %s2679 = sshll.u32 [#allocation4], 4
      %s2680 = int_to_ptr.vmem [resolvable:$true] %s2679
      %2682 = dma.vmem_to_hbm [thread:$0]  %s2680, 64, %s4, [#allocation5]
    $region25: #{tpu_custom_call.1} parent=1 // pred_fallthru
      _
    // Predicated region
    $region26: #{tpu_custom_call.1} parent=1 // pred_check
      _
    $region27: #{tpu_custom_call.1} parent=1 // pred_check_branch
      %2684 = sbr.rel (0) target = $region29
    $region28: #{tpu_custom_call.1} parent=1 // pred_region
      %2685 = dma.done [#allocation5], 64
    $region29: #{tpu_custom_call.1} parent=1 // pred_fallthru
      _
    %2686 = vsyncpa [#allocation5], 1

</llo_original>
